<compile_context>
chip_gen: v5e
topology: v5e:2x2
jax: 0.10.0
libtpu: 0.0.40
codegen_flags: <defaults>
</compile_context>

<pallas_src>
import functools

import jax
import jax.numpy as jnp
import numpy as np
from jax.experimental import pallas as pl
from jax.experimental.pallas import tpu as pltpu


# -----------------------------------------------------------------------------
# Helpers: padding / tile selection
# -----------------------------------------------------------------------------
def _round_up(x, m):
    return (x + m - 1) // m * m


def _choose_tile(dim, candidates):
    for t in candidates:
        if dim % t == 0:
            return t
    raise ValueError(f"no tile in {candidates} divides {dim}")


# -----------------------------------------------------------------------------
# Pallas kernel: tiled GEMM, f32 accumulator, fused bias (+ LeakyReLU 0.01)
# -----------------------------------------------------------------------------
def _gemm_kernel(a_ref, w_ref, b_ref, o_ref, acc_ref, *, lrelu):
    @pl.when(pl.program_id(2) == 0)
    def _():
        acc_ref[...] = jnp.zeros_like(acc_ref)

    acc_ref[...] += jnp.dot(a_ref[...], w_ref[...],
                            preferred_element_type=jnp.float32)

    @pl.when(pl.program_id(2) == pl.num_programs(2) - 1)
    def _():
        out = acc_ref[...] + b_ref[...]
        if lrelu:
            out = jnp.where(out >= 0, out, 0.01 * out)  # LeakyReLU(0.01)
        o_ref[...] = out.astype(o_ref.dtype)


def pallas_gemm(a, w_packed, b_packed, *, n_valid, lrelu, out_dtype):
    """(M, K) bf16 @ (K, N_pad) bf16 + bias, optional LeakyReLU(0.01).

    `w_packed` / `b_packed` are already padded & cast (done once at build
    time); `a` is the im2col matrix, already K-padded. f32 accumulation,
    output stored in `out_dtype` (bf16 for hidden layers).
    """
    M, K = a.shape
    K2, N_pad = w_packed.shape
    assert K == K2 and K % 128 == 0 and N_pad % 128 == 0

    M_pad = _round_up(M, 8)
    if M_pad != M:                      # rare: only if B*OH*OW not a mult of 8
        a = jnp.pad(a, ((0, M_pad - M), (0, 0)))

    tm = _choose_tile(M_pad, (256, 128, 64, 32, 16, 8))
    tn = _choose_tile(N_pad, (256, 128))
    tk = _choose_tile(K, (1024, 512, 256, 128))

    # v7x megacore: make sure the parallel grid has >=2 blocks when possible.
    if (M_pad // tm) * (N_pad // tn) < 2:
        for t in (128, 64, 32, 16, 8):
            if t < tm and M_pad % t == 0:
                tm = t
                break

    grid = (M_pad // tm, N_pad // tn, K // tk)

    out_itemsize = 2 if out_dtype == jnp.bfloat16 else 4
    cost = pl.CostEstimate(
        flops=2 * M_pad * N_pad * K,
        transcendentals=0,
        bytes_accessed=(M_pad * K + K * N_pad) * 2
        + M_pad * N_pad * out_itemsize + N_pad * 4,
    )

    out = pl.pallas_call(
        functools.partial(_gemm_kernel, lrelu=lrelu),
        out_shape=jax.ShapeDtypeStruct((M_pad, N_pad), out_dtype),
        grid_spec=pltpu.PrefetchScalarGridSpec(
            num_scalar_prefetch=0,
            grid=grid,
            in_specs=[
                pl.BlockSpec((tm, tk), lambda i, j, k: (i, k)),
                pl.BlockSpec((tk, tn), lambda i, j, k: (k, j)),
                pl.BlockSpec((1, tn), lambda i, j, k: (0, j)),
            ],
            out_specs=pl.BlockSpec((tm, tn), lambda i, j, k: (i, j)),
            scratch_shapes=[pltpu.VMEM((tm, tn), jnp.float32)],
        ),
        compiler_params=pltpu.CompilerParams(
            dimension_semantics=("parallel", "parallel", "arbitrary"),
            vmem_limit_bytes=48 * 1024 * 1024,
        ),
        cost_estimate=cost,
    )(a, w_packed, b_packed)

    return out[:M, :n_valid]


# -----------------------------------------------------------------------------
# Conv (4x4, stride 2, pad 1) = im2col (bf16, pre-padded K) + Pallas GEMM
# -----------------------------------------------------------------------------
def _im2col(x_nhwc, k, stride, pad):
    B, H, W, C = x_nhwc.shape
    xp = jnp.pad(x_nhwc, ((0, 0), (pad, pad), (pad, pad), (0, 0)))
    OH = (H + 2 * pad - k) // stride + 1
    OW = (W + 2 * pad - k) // stride + 1
    patches = [xp[:, kh:kh + stride * OH:stride, kw:kw + stride * OW:stride, :]
               for kh in range(k) for kw in range(k)]
    p = jnp.stack(patches, axis=3)                 # (B, OH, OW, k*k, C)
    return p.reshape(B * OH * OW, k * k * C), (B, OH, OW)


def conv_main_layer(h_bf16, layer):
    """One spectral-norm Conv2d(k=4, s=2, p=1) + LeakyReLU(0.01), NHWC bf16."""
    w_packed, b_packed = layer["w_packed"], layer["b_packed"]
    cout = layer["w"].shape[0]
    k = 4
    c_pad = w_packed.shape[0] // (k * k)
    C = h_bf16.shape[-1]
    if C < c_pad:                                   # only the 3-channel input
        h_bf16 = jnp.pad(h_bf16, ((0, 0), (0, 0), (0, 0), (0, c_pad - C)))
    cols, (B, OH, OW) = _im2col(h_bf16, k, 2, 1)
    out = pallas_gemm(cols, w_packed, b_packed,
                      n_valid=cout, lrelu=True, out_dtype=jnp.bfloat16)
    return out.reshape(B, OH, OW, cout)


# -----------------------------------------------------------------------------
# Parameter construction + spectral norm (1 power iteration) + weight packing
# -----------------------------------------------------------------------------
def _spectral_normalize(w, u, eps=1e-12):
    w_mat = w.reshape(w.shape[0], -1)               # (Cout, Cin*K*K)
    v = w_mat.T @ u
    v = v / (jnp.linalg.norm(v) + eps)
    u_new = w_mat @ v
    u_new = u_new / (jnp.linalg.norm(u_new) + eps)
    sigma = u_new @ (w_mat @ v)
    return w / sigma


def _pack_weight(w_oihw, c_pad, n_pad):
    """(Cout, Cin, KH, KW) -> (KH*KW*c_pad, n_pad) bf16, im2col-compatible."""
    cout, cin, kh, kw = w_oihw.shape
    wt = jnp.transpose(w_oihw, (2, 3, 1, 0))        # (KH, KW, Cin, Cout)
    wt = jnp.pad(wt, ((0, 0), (0, 0), (0, c_pad - cin), (0, n_pad - cout)))
    return wt.reshape(kh * kw * c_pad, n_pad).astype(jnp.bfloat16)


def build_params(key, image_size, conv_dim, c_dim, repeat_num):
    main = []
    in_ch, out_ch = 3, conv_dim
    for _ in range(repeat_num):
        key, kw_, kb_, ku_ = jax.random.split(key, 4)
        w = 0.05 * jax.random.normal(kw_, (out_ch, in_ch, 4, 4), jnp.float32)
        b = 0.05 * jax.random.normal(kb_, (out_ch,), jnp.float32)
        u = jax.random.normal(ku_, (out_ch,), jnp.float32)
        u = u / (jnp.linalg.norm(u) + 1e-12)
        w_sn = _spectral_normalize(w, u)
        c_pad = _round_up(in_ch, 8)                 # 16*c_pad % 128 == 0
        n_pad = _round_up(out_ch, 128)
        main.append({
            "w": w_sn,                               # f32 OIHW (reference)
            "b": b,
            "w_packed": _pack_weight(w_sn, c_pad, n_pad),
            "b_packed": jnp.zeros((1, n_pad), jnp.float32).at[0, :out_ch].set(b),
        })
        in_ch, out_ch = out_ch, out_ch * 2
    curr_dim = in_ch
    k2 = image_size // (2 ** repeat_num)
    key, k1_, k2_ = jax.random.split(key, 3)
    conv1_w = 0.05 * jax.random.normal(k1_, (1, curr_dim, 3, 3), jnp.float32)
    conv2_w = 0.05 * jax.random.normal(k2_, (c_dim, curr_dim, k2, k2), jnp.float32)
    return {"main": main, "conv1_w": conv1_w, "conv2_w": conv2_w}


# -----------------------------------------------------------------------------
# Forward pass (matches Discriminator.forward)
# -----------------------------------------------------------------------------
@jax.jit
def discriminator_forward(x_nchw, params):
    # NCHW -> NHWC, cast to bf16 once; all hidden activations stay bf16.
    h = jnp.transpose(x_nchw, (0, 2, 3, 1)).astype(jnp.bfloat16)
    for layer in params["main"]:
        h = conv_main_layer(h, layer)
    h32 = h.astype(jnp.float32)
    # Tiny epilogue convs (N=1 and N=c_dim): plain JAX per the perf review —
    # a 128-lane-padded Pallas GEMM would do >40x redundant MXU work plus two
    # extra kernel launches whose fixed cost dominates at these sizes.
    out_src = jax.lax.conv_general_dilated(
        h32, params["conv1_w"], window_strides=(1, 1),
        padding=[(1, 1), (1, 1)],
        dimension_numbers=("NHWC", "OIHW", "NHWC"))
    out_src = jnp.transpose(out_src, (0, 3, 1, 2))   # (B, 1, H', W')
    out_cls = jnp.einsum("bhwc,nchw->bn", h32, params["conv2_w"])
    return out_src, out_cls


# -----------------------------------------------------------------------------
# Pure-JAX reference (lax.conv, f32 throughout) for correctness checking
# -----------------------------------------------------------------------------
def _ref_conv(x, w, b, stride, pad):
    out = jax.lax.conv_general_dilated(
        x, w, window_strides=(stride, stride),
        padding=[(pad, pad), (pad, pad)],
        dimension_numbers=("NCHW", "OIHW", "NCHW"))
    if b is not None:
        out = out + b.reshape(1, -1, 1, 1)
    return out


def reference_forward(x, params):
    h = x
    for layer in params["main"]:
        h = _ref_conv(h, layer["w"], layer["b"], 2, 1)
        h = jnp.where(h >= 0, h, 0.01 * h)
    out_src = _ref_conv(h, params["conv1_w"], None, 1, 1)
    out_cls = _ref_conv(h, params["conv2_w"], None, 1, 0)
    return out_src, out_cls.reshape(out_cls.shape[0], -1)


if __name__ == "__main__":
    # Small config consistent with the module: image_size=16, conv_dim=8,
    # c_dim=3, repeat_num=3  ->  final spatial 2x2, conv2 kernel_size=2.
    IMAGE_SIZE, CONV_DIM, C_DIM, REPEAT_NUM = 16, 8, 3, 3
    BATCH = 2

    key = jax.random.PRNGKey(0)
    key_x, key_p = jax.random.split(key)
    x = jax.random.normal(key_x, (BATCH, 3, IMAGE_SIZE, IMAGE_SIZE), jnp.float32)
    params = build_params(key_p, IMAGE_SIZE, CONV_DIM, C_DIM, REPEAT_NUM)

    out_src, out_cls = discriminator_forward(x, params)
    jax.block_until_ready((out_src, out_cls))

    assert out_src.shape == (BATCH, 1, IMAGE_SIZE // 2 ** REPEAT_NUM,
                             IMAGE_SIZE // 2 ** REPEAT_NUM)
    assert out_cls.shape == (BATCH, C_DIM)

    # Numerical check vs. a pure-JAX f32 reference (bf16 operands/activations
    # on the Pallas path -> loose tolerance).
    ref_src, ref_cls = reference_forward(x, params)
    np.testing.assert_allclose(np.asarray(out_src), np.asarray(ref_src),
                               atol=5e-2, rtol=5e-2)
    np.testing.assert_allclose(np.asarray(out_cls), np.asarray(ref_cls),
                               atol=5e-2, rtol=5e-2)

    print("KERNEL_OK")
</pallas_src>

<mosaic_0001>
module attributes {stable_mosaic.version = 11 : i64} {
  func.func @_gemm_kernel(%arg0: i32, %arg1: i32, %arg2: i32, %arg3: memref<64x128xbf16, #tpu.memory_space<vmem>>, %arg4: memref<128x128xbf16, #tpu.memory_space<vmem>>, %arg5: memref<1x128xf32, #tpu.memory_space<vmem>>, %arg6: memref<64x128xbf16, #tpu.memory_space<vmem>>, %arg7: memref<64x128xf32, #tpu.memory_space<vmem>>) attributes {dimension_semantics = [#tpu.dimension_semantics<parallel>, #tpu.dimension_semantics<parallel>, #tpu.dimension_semantics<arbitrary>], iteration_bounds = array<i64: 2, 1, 1>, scalar_prefetch = 0 : i64, scratch_operands = 1 : i64, tpu.core_type = #tpu.core_type<tc>, window_params = [{transform_indices = @transform_0, window_bounds = array<i64: 64, 128>}, {transform_indices = @transform_1, window_bounds = array<i64: 128, 128>}, {transform_indices = @transform_2, window_bounds = array<i64: 1, 128>}, {transform_indices = @transform_3, window_bounds = array<i64: 64, 128>}]} {
    %c0_i32 = arith.constant 0 : i32
    %0 = arith.cmpi eq, %arg2, %c0_i32 : i32
    %1 = arith.extui %0 : i1 to i32
    %c0_i32_0 = arith.constant 0 : i32
    %2 = arith.cmpi ne, %1, %c0_i32_0 : i32
    scf.if %2 {
      %cst_10 = arith.constant 0.000000e+00 : f32
      %12 = vector.broadcast %cst_10 : f32 to vector<64x128xf32>
      %c0_11 = arith.constant 0 : index
      %c0_12 = arith.constant 0 : index
      %13 = vector.load %arg7[%c0_11, %c0_12] : memref<64x128xf32, #tpu.memory_space<vmem>>, vector<64x128xf32>
      tpu.vector_store %arg7[%c0_11, %c0_12], %12 {strides = array<i32>} : memref<64x128xf32, #tpu.memory_space<vmem>>, vector<64x128xf32>,
    } else {
    }
    %c0 = arith.constant 0 : index
    %c0_1 = arith.constant 0 : index
    %3 = vector.load %arg7[%c0, %c0_1] : memref<64x128xf32, #tpu.memory_space<vmem>>, vector<64x128xf32>
    %c0_2 = arith.constant 0 : index
    %c0_3 = arith.constant 0 : index
    %4 = vector.load %arg3[%c0_2, %c0_3] : memref<64x128xbf16, #tpu.memory_space<vmem>>, vector<64x128xbf16>
    %c0_4 = arith.constant 0 : index
    %c0_5 = arith.constant 0 : index
    %5 = vector.load %arg4[%c0_4, %c0_5] : memref<128x128xbf16, #tpu.memory_space<vmem>>, vector<128x128xbf16>
    %cst = arith.constant dense<0.000000e+00> : vector<64x128xf32>
    %6 = tpu.matmul %4, %5, %cst {dimension_numbers = #tpu.dot_dimension_numbers<[1], [0], [0], [1], [0, 0, 1, 1], [], []>} : vector<64x128xbf16>, vector<128x128xbf16>, vector<64x128xf32> -> vector<64x128xf32>
    %7 = arith.addf %3, %6 : vector<64x128xf32>
    %c0_6 = arith.constant 0 : index
    %c0_7 = arith.constant 0 : index
    %8 = vector.load %arg7[%c0_6, %c0_7] : memref<64x128xf32, #tpu.memory_space<vmem>>, vector<64x128xf32>
    tpu.vector_store %arg7[%c0_6, %c0_7], %7 {strides = array<i32>} : memref<64x128xf32, #tpu.memory_space<vmem>>, vector<64x128xf32>,
    %c0_i32_8 = arith.constant 0 : i32
    %9 = arith.cmpi eq, %arg2, %c0_i32_8 : i32
    %10 = arith.extui %9 : i1 to i32
    %c0_i32_9 = arith.constant 0 : i32
    %11 = arith.cmpi ne, %10, %c0_i32_9 : i32
    scf.if %11 {
      %c0_10 = arith.constant 0 : index
      %c0_11 = arith.constant 0 : index
      %12 = vector.load %arg7[%c0_10, %c0_11] : memref<64x128xf32, #tpu.memory_space<vmem>>, vector<64x128xf32>
      %c0_12 = arith.constant 0 : index
      %c0_13 = arith.constant 0 : index
      %13 = vector.load %arg5[%c0_12, %c0_13] : memref<1x128xf32, #tpu.memory_space<vmem>>, vector<1x128xf32>
      %14 = vector.broadcast %13 : vector<1x128xf32> to vector<64x128xf32>
      %15 = arith.addf %12, %14 : vector<64x128xf32>
      %cst_14 = arith.constant 0.000000e+00 : f32
      %16 = vector.broadcast %cst_14 : f32 to vector<64x128xf32>
      %17 = arith.cmpf oge, %15, %16 : vector<64x128xf32>
      %cst_15 = arith.constant 0.00999999977 : f32
      %18 = vector.broadcast %cst_15 : f32 to vector<64x128xf32>
      %19 = arith.mulf %18, %15 : vector<64x128xf32>
      %20 = arith.select %17, %15, %19 : vector<64x128xi1>, vector<64x128xf32>
      %21 = arith.truncf %20 : vector<64x128xf32> to vector<64x128xbf16>
      %c0_16 = arith.constant 0 : index
      %c0_17 = arith.constant 0 : index
      %22 = vector.load %arg6[%c0_16, %c0_17] : memref<64x128xbf16, #tpu.memory_space<vmem>>, vector<64x128xbf16>
      tpu.vector_store %arg6[%c0_16, %c0_17], %21 {strides = array<i32>} : memref<64x128xbf16, #tpu.memory_space<vmem>>, vector<64x128xbf16>,
    } else {
    }
    return
  }
  func.func @transform_0(%arg0: i32, %arg1: i32, %arg2: i32) -> (i32, i32) {
    %c0_i32 = arith.constant 0 : i32
    return %arg0, %arg2 : i32, i32
  }
  func.func @transform_1(%arg0: i32, %arg1: i32, %arg2: i32) -> (i32, i32) {
    %c0_i32 = arith.constant 0 : i32
    return %arg2, %arg1 : i32, i32
  }
  func.func @transform_2(%arg0: i32, %arg1: i32, %arg2: i32) -> (i32, i32) {
    %c0_i32 = arith.constant 0 : i32
    %c0_i32_0 = arith.constant 0 : i32
    return %c0_i32, %arg1 : i32, i32
  }
  func.func @transform_3(%arg0: i32, %arg1: i32, %arg2: i32) -> (i32, i32) {
    %c0_i32 = arith.constant 0 : i32
    return %arg0, %arg1 : i32, i32
  }
}

module attributes {stable_mosaic.version = 11 : i64} {
  func.func @_gemm_kernel(%arg0: i32, %arg1: i32, %arg2: i32, %arg3: memref<16x128xbf16, #tpu.memory_space<vmem>>, %arg4: memref<128x128xbf16, #tpu.memory_space<vmem>>, %arg5: memref<1x128xf32, #tpu.memory_space<vmem>>, %arg6: memref<16x128xbf16, #tpu.memory_space<vmem>>, %arg7: memref<16x128xf32, #tpu.memory_space<vmem>>) attributes {dimension_semantics = [#tpu.dimension_semantics<parallel>, #tpu.dimension_semantics<parallel>, #tpu.dimension_semantics<arbitrary>], iteration_bounds = array<i64: 2, 1, 1>, scalar_prefetch = 0 : i64, scratch_operands = 1 : i64, tpu.core_type = #tpu.core_type<tc>, window_params = [{transform_indices = @transform_0, window_bounds = array<i64: 16, 128>}, {transform_indices = @transform_1, window_bounds = array<i64: 128, 128>}, {transform_indices = @transform_2, window_bounds = array<i64: 1, 128>}, {transform_indices = @transform_3, window_bounds = array<i64: 16, 128>}]} {
    %c0_i32 = arith.constant 0 : i32
    %0 = arith.cmpi eq, %arg2, %c0_i32 : i32
    %1 = arith.extui %0 : i1 to i32
    %c0_i32_0 = arith.constant 0 : i32
    %2 = arith.cmpi ne, %1, %c0_i32_0 : i32
    scf.if %2 {
      %cst_10 = arith.constant 0.000000e+00 : f32
      %12 = vector.broadcast %cst_10 : f32 to vector<16x128xf32>
      %c0_11 = arith.constant 0 : index
      %c0_12 = arith.constant 0 : index
      %13 = vector.load %arg7[%c0_11, %c0_12] : memref<16x128xf32, #tpu.memory_space<vmem>>, vector<16x128xf32>
      tpu.vector_store %arg7[%c0_11, %c0_12], %12 {strides = array<i32>} : memref<16x128xf32, #tpu.memory_space<vmem>>, vector<16x128xf32>,
    } else {
    }
    %c0 = arith.constant 0 : index
    %c0_1 = arith.constant 0 : index
    %3 = vector.load %arg7[%c0, %c0_1] : memref<16x128xf32, #tpu.memory_space<vmem>>, vector<16x128xf32>
    %c0_2 = arith.constant 0 : index
    %c0_3 = arith.constant 0 : index
    %4 = vector.load %arg3[%c0_2, %c0_3] : memref<16x128xbf16, #tpu.memory_space<vmem>>, vector<16x128xbf16>
    %c0_4 = arith.constant 0 : index
    %c0_5 = arith.constant 0 : index
    %5 = vector.load %arg4[%c0_4, %c0_5] : memref<128x128xbf16, #tpu.memory_space<vmem>>, vector<128x128xbf16>
    %cst = arith.constant dense<0.000000e+00> : vector<16x128xf32>
    %6 = tpu.matmul %4, %5, %cst {dimension_numbers = #tpu.dot_dimension_numbers<[1], [0], [0], [1], [0, 0, 1, 1], [], []>} : vector<16x128xbf16>, vector<128x128xbf16>, vector<16x128xf32> -> vector<16x128xf32>
    %7 = arith.addf %3, %6 : vector<16x128xf32>
    %c0_6 = arith.constant 0 : index
    %c0_7 = arith.constant 0 : index
    %8 = vector.load %arg7[%c0_6, %c0_7] : memref<16x128xf32, #tpu.memory_space<vmem>>, vector<16x128xf32>
    tpu.vector_store %arg7[%c0_6, %c0_7], %7 {strides = array<i32>} : memref<16x128xf32, #tpu.memory_space<vmem>>, vector<16x128xf32>,
    %c0_i32_8 = arith.constant 0 : i32
    %9 = arith.cmpi eq, %arg2, %c0_i32_8 : i32
    %10 = arith.extui %9 : i1 to i32
    %c0_i32_9 = arith.constant 0 : i32
    %11 = arith.cmpi ne, %10, %c0_i32_9 : i32
    scf.if %11 {
      %c0_10 = arith.constant 0 : index
      %c0_11 = arith.constant 0 : index
      %12 = vector.load %arg7[%c0_10, %c0_11] : memref<16x128xf32, #tpu.memory_space<vmem>>, vector<16x128xf32>
      %c0_12 = arith.constant 0 : index
      %c0_13 = arith.constant 0 : index
      %13 = vector.load %arg5[%c0_12, %c0_13] : memref<1x128xf32, #tpu.memory_space<vmem>>, vector<1x128xf32>
      %14 = vector.broadcast %13 : vector<1x128xf32> to vector<16x128xf32>
      %15 = arith.addf %12, %14 : vector<16x128xf32>
      %cst_14 = arith.constant 0.000000e+00 : f32
      %16 = vector.broadcast %cst_14 : f32 to vector<16x128xf32>
      %17 = arith.cmpf oge, %15, %16 : vector<16x128xf32>
      %cst_15 = arith.constant 0.00999999977 : f32
      %18 = vector.broadcast %cst_15 : f32 to vector<16x128xf32>
      %19 = arith.mulf %18, %15 : vector<16x128xf32>
      %20 = arith.select %17, %15, %19 : vector<16x128xi1>, vector<16x128xf32>
      %21 = arith.truncf %20 : vector<16x128xf32> to vector<16x128xbf16>
      %c0_16 = arith.constant 0 : index
      %c0_17 = arith.constant 0 : index
      %22 = vector.load %arg6[%c0_16, %c0_17] : memref<16x128xbf16, #tpu.memory_space<vmem>>, vector<16x128xbf16>
      tpu.vector_store %arg6[%c0_16, %c0_17], %21 {strides = array<i32>} : memref<16x128xbf16, #tpu.memory_space<vmem>>, vector<16x128xbf16>,
    } else {
    }
    return
  }
  func.func @transform_0(%arg0: i32, %arg1: i32, %arg2: i32) -> (i32, i32) {
    %c0_i32 = arith.constant 0 : i32
    return %arg0, %arg2 : i32, i32
  }
  func.func @transform_1(%arg0: i32, %arg1: i32, %arg2: i32) -> (i32, i32) {
    %c0_i32 = arith.constant 0 : i32
    return %arg2, %arg1 : i32, i32
  }
  func.func @transform_2(%arg0: i32, %arg1: i32, %arg2: i32) -> (i32, i32) {
    %c0_i32 = arith.constant 0 : i32
    %c0_i32_0 = arith.constant 0 : i32
    return %c0_i32, %arg1 : i32, i32
  }
  func.func @transform_3(%arg0: i32, %arg1: i32, %arg2: i32) -> (i32, i32) {
    %c0_i32 = arith.constant 0 : i32
    return %arg0, %arg1 : i32, i32
  }
}

module attributes {stable_mosaic.version = 11 : i64} {
  func.func @_gemm_kernel(%arg0: i32, %arg1: i32, %arg2: i32, %arg3: memref<8x256xbf16, #tpu.memory_space<vmem>>, %arg4: memref<256x128xbf16, #tpu.memory_space<vmem>>, %arg5: memref<1x128xf32, #tpu.memory_space<vmem>>, %arg6: memref<8x128xbf16, #tpu.memory_space<vmem>>, %arg7: memref<8x128xf32, #tpu.memory_space<vmem>>) attributes {dimension_semantics = [#tpu.dimension_semantics<parallel>, #tpu.dimension_semantics<parallel>, #tpu.dimension_semantics<arbitrary>], iteration_bounds = array<i64: 1, 1, 1>, scalar_prefetch = 0 : i64, scratch_operands = 1 : i64, tpu.core_type = #tpu.core_type<tc>, window_params = [{transform_indices = @transform_0, window_bounds = array<i64: 8, 256>}, {transform_indices = @transform_1, window_bounds = array<i64: 256, 128>}, {transform_indices = @transform_2, window_bounds = array<i64: 1, 128>}, {transform_indices = @transform_3, window_bounds = array<i64: 8, 128>}]} {
    %c0_i32 = arith.constant 0 : i32
    %0 = arith.cmpi eq, %arg2, %c0_i32 : i32
    %1 = arith.extui %0 : i1 to i32
    %c0_i32_0 = arith.constant 0 : i32
    %2 = arith.cmpi ne, %1, %c0_i32_0 : i32
    scf.if %2 {
      %cst_10 = arith.constant 0.000000e+00 : f32
      %12 = vector.broadcast %cst_10 : f32 to vector<8x128xf32>
      %c0_11 = arith.constant 0 : index
      %c0_12 = arith.constant 0 : index
      %13 = vector.load %arg7[%c0_11, %c0_12] : memref<8x128xf32, #tpu.memory_space<vmem>>, vector<8x128xf32>
      tpu.vector_store %arg7[%c0_11, %c0_12], %12 {strides = array<i32>} : memref<8x128xf32, #tpu.memory_space<vmem>>, vector<8x128xf32>,
    } else {
    }
    %c0 = arith.constant 0 : index
    %c0_1 = arith.constant 0 : index
    %3 = vector.load %arg7[%c0, %c0_1] : memref<8x128xf32, #tpu.memory_space<vmem>>, vector<8x128xf32>
    %c0_2 = arith.constant 0 : index
    %c0_3 = arith.constant 0 : index
    %4 = vector.load %arg3[%c0_2, %c0_3] : memref<8x256xbf16, #tpu.memory_space<vmem>>, vector<8x256xbf16>
    %c0_4 = arith.constant 0 : index
    %c0_5 = arith.constant 0 : index
    %5 = vector.load %arg4[%c0_4, %c0_5] : memref<256x128xbf16, #tpu.memory_space<vmem>>, vector<256x128xbf16>
    %cst = arith.constant dense<0.000000e+00> : vector<8x128xf32>
    %6 = tpu.matmul %4, %5, %cst {dimension_numbers = #tpu.dot_dimension_numbers<[1], [0], [0], [1], [0, 0, 1, 1], [], []>} : vector<8x256xbf16>, vector<256x128xbf16>, vector<8x128xf32> -> vector<8x128xf32>
    %7 = arith.addf %3, %6 : vector<8x128xf32>
    %c0_6 = arith.constant 0 : index
    %c0_7 = arith.constant 0 : index
    %8 = vector.load %arg7[%c0_6, %c0_7] : memref<8x128xf32, #tpu.memory_space<vmem>>, vector<8x128xf32>
    tpu.vector_store %arg7[%c0_6, %c0_7], %7 {strides = array<i32>} : memref<8x128xf32, #tpu.memory_space<vmem>>, vector<8x128xf32>,
    %c0_i32_8 = arith.constant 0 : i32
    %9 = arith.cmpi eq, %arg2, %c0_i32_8 : i32
    %10 = arith.extui %9 : i1 to i32
    %c0_i32_9 = arith.constant 0 : i32
    %11 = arith.cmpi ne, %10, %c0_i32_9 : i32
    scf.if %11 {
      %c0_10 = arith.constant 0 : index
      %c0_11 = arith.constant 0 : index
      %12 = vector.load %arg7[%c0_10, %c0_11] : memref<8x128xf32, #tpu.memory_space<vmem>>, vector<8x128xf32>
      %c0_12 = arith.constant 0 : index
      %c0_13 = arith.constant 0 : index
      %13 = vector.load %arg5[%c0_12, %c0_13] : memref<1x128xf32, #tpu.memory_space<vmem>>, vector<1x128xf32>
      %14 = vector.broadcast %13 : vector<1x128xf32> to vector<8x128xf32>
      %15 = arith.addf %12, %14 : vector<8x128xf32>
      %cst_14 = arith.constant 0.000000e+00 : f32
      %16 = vector.broadcast %cst_14 : f32 to vector<8x128xf32>
      %17 = arith.cmpf oge, %15, %16 : vector<8x128xf32>
      %cst_15 = arith.constant 0.00999999977 : f32
      %18 = vector.broadcast %cst_15 : f32 to vector<8x128xf32>
      %19 = arith.mulf %18, %15 : vector<8x128xf32>
      %20 = arith.select %17, %15, %19 : vector<8x128xi1>, vector<8x128xf32>
      %21 = arith.truncf %20 : vector<8x128xf32> to vector<8x128xbf16>
      %c0_16 = arith.constant 0 : index
      %c0_17 = arith.constant 0 : index
      %22 = vector.load %arg6[%c0_16, %c0_17] : memref<8x128xbf16, #tpu.memory_space<vmem>>, vector<8x128xbf16>
      tpu.vector_store %arg6[%c0_16, %c0_17], %21 {strides = array<i32>} : memref<8x128xbf16, #tpu.memory_space<vmem>>, vector<8x128xbf16>,
    } else {
    }
    return
  }
  func.func @transform_0(%arg0: i32, %arg1: i32, %arg2: i32) -> (i32, i32) {
    %c0_i32 = arith.constant 0 : i32
    return %arg0, %arg2 : i32, i32
  }
  func.func @transform_1(%arg0: i32, %arg1: i32, %arg2: i32) -> (i32, i32) {
    %c0_i32 = arith.constant 0 : i32
    return %arg2, %arg1 : i32, i32
  }
  func.func @transform_2(%arg0: i32, %arg1: i32, %arg2: i32) -> (i32, i32) {
    %c0_i32 = arith.constant 0 : i32
    %c0_i32_0 = arith.constant 0 : i32
    return %c0_i32, %arg1 : i32, i32
  }
  func.func @transform_3(%arg0: i32, %arg1: i32, %arg2: i32) -> (i32, i32) {
    %c0_i32 = arith.constant 0 : i32
    return %arg0, %arg1 : i32, i32
  }
}

</mosaic_0001>

<llo_original>
// kernel: discriminator_forward.3
$region0: #{discriminator_forward.3}
  #allocation0 [shape = 'u32[]', space=smem, size = 0x4, offset = 0x4, fixed_abs, tag = 'smem constant byte address 0x4 - core index']
  #allocation1 [shape = 'u32[72,128]{1,0:T(1,128)}', space=vmem, size = 0x9000, scoped, tag = 'internal scratch']
  #allocation2 [shape = 'f32[64,128]{1,0:T(8,128)}', space=vmem, size = 0x8000, scoped, tag = 'scratch operand']
  %s0 = inlined_call_operand.vmem [shape: bf16[128,128], index: 0, kind: input, shape index: {}]
  %s1 = inlined_call_operand.vmem [shape: bf16[128,128], index: 1, kind: input, shape index: {}]
  %s2 = inlined_call_operand.vmem [shape: f32[1,128], index: 2, kind: input, shape index: {}]
  %s3 = inlined_call_operand.vmem [shape: bf16[128,128], index: 3, kind: output, shape index: {}]
  %s4 = sld [smem:[#allocation0]]
  $region53: #{discriminator_forward.3} parent=0
    _
  %s6 = ssub.s32 1, %s4
  %s7 = scalar_select 0, %s6, %s4
  loop: start=0, step=1, limit=4
  $region2: #{discriminator_forward.3} parent=0 // loop_pre_header
    _
  $region3: #{discriminator_forward.3} parent=0 // loop_header
    %s9 = sphi 0, %s13
    %p10 = scmp.ge.s32.totalorder %s9, 4
    %s16 = sphi 0, %s35
    %s17 = sphi 0, %s31
    %s18 = sphi 0, %s27
    %s19 = sphi 0, %s16
    %s20 = sphi 0, %s17
    %s21 = sphi 0, %s18
    %s22 = sphi 0, %s19
    %s23 = sphi 0, %s20
    %s24 = sphi 0, %s21
    %s40 = sphi 0, %s42
    %s43 = sphi 0, %s40
    %s44 = sphi 0, %s43
    %s60 = sphi 0, %s44
    %s68 = sphi 0, %s70
    %s71 = sphi 0, %s68
    %s72 = sphi 0, %s71
    %s88 = sphi 0, %s72
    %s94 = sphi 0, %s96
    %s97 = sphi 0, %s94
    %s98 = sphi 0, %s97
    %s114 = sphi 0, %s98
    %s122 = sphi 0, %s124
    %s125 = sphi 0, %s122
    %s126 = sphi 0, %s125
    %s142 = sphi 0, %s126
  $region4: #{discriminator_forward.3} parent=0 // loop_header_branch
    %12 = sbr.rel (%p10) target = $region8
  $region5: #{discriminator_forward.3} parent=0 // loop_body
    %s14 = ssub.s32 %s9, 1
    %s15 = ssub.s32 %s9, 2
    %s25 = sadd.s32 1, %s18
    %p26 = scmp.ge.s32.totalorder %s25, 1
    %s27 = scalar_select %p26, 0, %s25
    %s28 = sadd.s32 1, %s17
    %s29 = scalar_select %p26, %s28, %s17
    %p30 = scmp.ge.s32.totalorder %s29, 1
    %s31 = scalar_select %p30, 0, %s29
    %s32 = sadd.s32 1, %s16
    %s33 = scalar_select %p30, %s32, %s16
    %p34 = scmp.ge.s32.totalorder %s33, 2
    %s35 = scalar_select %p34, 0, %s33
    %s36 = ssub.s32 %s16, %s35
    %s37 = ssub.s32 %s18, %s27
    %s38 = sor.u32 %s36, %s37
    %p39 = scmp.eq.s32.totalorder %s38, 0
    %s41 = sadd.s32 %s40, 1
    %s42 = scalar_select %p39, %s40, %s41
    %p45 = pneg %p39
    %p46 = scmp.eq.s32.totalorder %s9, 1
    %p47 = por %p45, %p46
    %p48 = scmp.ne.s32.totalorder %s40, %s43
    %p49 = scmp.eq.s32.totalorder %s9, 0
    %p50 = por %p48, %p49
    %p51 = scmp.ne.s32.totalorder %s40, %s43
    %p52 = scmp.eq.s32.totalorder %s14, 1
    %p53 = por %p51, %p52
    %p54 = scmp.ne.s32.totalorder %s43, %s44
    %p55 = scmp.eq.s32.totalorder %s14, 0
    %p56 = por %p54, %p55
    %p57 = scmp.ne.s32.totalorder %s43, %s44
    %p58 = scmp.eq.s32.totalorder %s15, 1
    %p59 = por %p57, %p58
    %p61 = scmp.ne.s32.totalorder %s44, %s60
    %p62 = scmp.eq.s32.totalorder %s15, 0
    %p63 = por %p61, %p62
    %s64 = ssub.s32 %s18, %s27
    %s65 = ssub.s32 %s17, %s31
    %s66 = sor.u32 %s64, %s65
    %p67 = scmp.eq.s32.totalorder %s66, 0
    %s69 = sadd.s32 %s68, 1
    %s70 = scalar_select %p67, %s68, %s69
    %p73 = pneg %p67
    %p74 = scmp.eq.s32.totalorder %s9, 1
    %p75 = por %p73, %p74
    %p76 = scmp.ne.s32.totalorder %s68, %s71
    %p77 = scmp.eq.s32.totalorder %s9, 0
    %p78 = por %p76, %p77
    %p79 = scmp.ne.s32.totalorder %s68, %s71
    %p80 = scmp.eq.s32.totalorder %s14, 1
    %p81 = por %p79, %p80
    %p82 = scmp.ne.s32.totalorder %s71, %s72
    %p83 = scmp.eq.s32.totalorder %s14, 0
    %p84 = por %p82, %p83
    %p85 = scmp.ne.s32.totalorder %s71, %s72
    %p86 = scmp.eq.s32.totalorder %s15, 1
    %p87 = por %p85, %p86
    %p89 = scmp.ne.s32.totalorder %s72, %s88
    %p90 = scmp.eq.s32.totalorder %s15, 0
    %p91 = por %p89, %p90
    %s92 = ssub.s32 %s17, %s31
    %p93 = scmp.eq.s32.totalorder %s92, 0
    %s95 = sadd.s32 %s94, 1
    %s96 = scalar_select %p93, %s94, %s95
    %p99 = pneg %p93
    %p100 = scmp.eq.s32.totalorder %s9, 1
    %p101 = por %p99, %p100
    %p102 = scmp.ne.s32.totalorder %s94, %s97
    %p103 = scmp.eq.s32.totalorder %s9, 0
    %p104 = por %p102, %p103
    %p105 = scmp.ne.s32.totalorder %s94, %s97
    %p106 = scmp.eq.s32.totalorder %s14, 1
    %p107 = por %p105, %p106
    %p108 = scmp.ne.s32.totalorder %s97, %s98
    %p109 = scmp.eq.s32.totalorder %s14, 0
    %p110 = por %p108, %p109
    %p111 = scmp.ne.s32.totalorder %s97, %s98
    %p112 = scmp.eq.s32.totalorder %s15, 1
    %p113 = por %p111, %p112
    %p115 = scmp.ne.s32.totalorder %s98, %s114
    %p116 = scmp.eq.s32.totalorder %s15, 0
    %p117 = por %p115, %p116
    %s118 = ssub.s32 %s16, %s35
    %s119 = ssub.s32 %s17, %s31
    %s120 = sor.u32 %s118, %s119
    %p121 = scmp.eq.s32.totalorder %s120, 0
    %s123 = sadd.s32 %s122, 1
    %s124 = scalar_select %p121, %s122, %s123
    %p127 = pneg %p121
    %p128 = scmp.eq.s32.totalorder %s9, 1
    %p129 = por %p127, %p128
    %p130 = scmp.ne.s32.totalorder %s122, %s125
    %p131 = scmp.eq.s32.totalorder %s9, 0
    %p132 = por %p130, %p131
    %p133 = scmp.ne.s32.totalorder %s122, %s125
    %p134 = scmp.eq.s32.totalorder %s14, 1
    %p135 = por %p133, %p134
    %p136 = scmp.ne.s32.totalorder %s125, %s126
    %p137 = scmp.eq.s32.totalorder %s14, 0
    %p138 = por %p136, %p137
    %p139 = scmp.ne.s32.totalorder %s125, %s126
    %p140 = scmp.eq.s32.totalorder %s15, 1
    %p141 = por %p139, %p140
    %p143 = scmp.ne.s32.totalorder %s126, %s142
    %p144 = scmp.eq.s32.totalorder %s15, 0
    %p145 = por %p143, %p144
    %p146 = scmp.le.s32.totalorder 1, %s9
    %p147 = scmp.lt.s32.totalorder %s9, 3
    %p148 = pnand %p146, %p147
    %p149 = pneg %p148
    // Predicated region
    $region9: #{discriminator_forward.3} parent=5 // pred_check
      _
    $region10: #{discriminator_forward.3} parent=5 // pred_check_branch
      %151 = sbr.rel (%p148) target = $region12
    $region11: #{discriminator_forward.3} parent=5 // pred_region
      %s152 = ssub.s32 %s9, 1
      // Predicated region
      $region13: #{discriminator_forward.3} parent=11 // pred_check
        %p153 = pneg %p84
      $region14: #{discriminator_forward.3} parent=11 // pred_check_branch
        %155 = sbr.rel (%p153) target = $region16
      $region15: #{discriminator_forward.3} parent=11 // pred_region
        %s156 = smul.u32 16, %s21
        %p157 = scmp.lt.s32.totalorder %s156, 15
        %s158 = scalar_select %p157, %s156, 15
        %p159 = scmp.lt.s32.totalorder %s20, 0
        %s160 = scalar_select %p159, %s20, 0
        %s161 = sadd.s32 %s160, %s158
        %s162 = smul.addr %s161, 4
        %s163 = scalar_lea.vmem %s1, %s162
        %s164 = smul.u32 16, %s21
      $region16: #{discriminator_forward.3} parent=11 // pred_fallthru
        _
      // Predicated region
      $region17: #{discriminator_forward.3} parent=11 // pred_check
        %p165 = pneg %p110
      $region18: #{discriminator_forward.3} parent=11 // pred_check_branch
        %167 = sbr.rel (%p165) target = $region20
      $region19: #{discriminator_forward.3} parent=11 // pred_region
        %p168 = scmp.lt.s32.totalorder %s20, 0
        %s169 = scalar_select %p168, %s20, 0
        %s170 = scalar_lea.vmem %s2, %s169
      $region20: #{discriminator_forward.3} parent=11 // pred_fallthru
        _
    $region12: #{discriminator_forward.3} parent=5 // pred_fallthru
      _
    %p171 = scmp.lt.s32.totalorder %s9, 2
    // Predicated region
    $region21: #{discriminator_forward.3} parent=5 // pred_check
      %p172 = pneg %p171
    $region22: #{discriminator_forward.3} parent=5 // pred_check_branch
      %174 = sbr.rel (%p172) target = $region24
    $region23: #{discriminator_forward.3} parent=5 // pred_region
      // Predicated region
      $region25: #{discriminator_forward.3} parent=23 // pred_check
        %p175 = pneg %p50
      $region26: #{discriminator_forward.3} parent=23 // pred_check_branch
        %177 = sbr.rel (%p175) target = $region28
      $region27: #{discriminator_forward.3} parent=23 // pred_region
        %s178 = smul.u32 8, %s16
        %p179 = scmp.lt.s32.totalorder %s178, 15
        %s180 = scalar_select %p179, %s178, 15
        %p181 = scmp.lt.s32.totalorder %s18, 0
        %s182 = scalar_select %p181, %s18, 0
        %s183 = sadd.s32 %s182, %s180
        %s184 = smul.addr %s183, 4
        %s185 = scalar_lea.vmem %s0, %s184
        %s186 = smul.u32 8, %s16
      $region28: #{discriminator_forward.3} parent=23 // pred_fallthru
        _
    $region24: #{discriminator_forward.3} parent=5 // pred_fallthru
      _
    %p187 = scmp.le.s32.totalorder 1, %s9
    %p188 = scmp.lt.s32.totalorder %s9, 3
    %p189 = pnand %p187, %p188
    %p190 = pneg %p189
    // Predicated region
    $region29: #{discriminator_forward.3} parent=5 // pred_check
      _
    $region30: #{discriminator_forward.3} parent=5 // pred_check_branch
      %192 = sbr.rel (%p189) target = $region32
    $region31: #{discriminator_forward.3} parent=5 // pred_region
      %s193 = ssub.s32 %s9, 1
      %s194 = smul.u32 8, %s19
      %p195 = scmp.lt.s32.totalorder %s194, 15
      %s196 = scalar_select %p195, %s194, 15
      %p197 = scmp.lt.s32.totalorder %s21, 0
      %s198 = scalar_select %p197, %s21, 0
      %s199 = sadd.s32 %s198, %s196
      %s200 = smul.addr %s199, 4
      %s201 = scalar_lea.vmem %s0, %s200
      %p202 = pneg %p56
      %p203 = pneg %p53
      %s204 = smul.u32 16, %s21
      %p205 = scmp.lt.s32.totalorder %s204, 15
      %s206 = scalar_select %p205, %s204, 15
      %p207 = scmp.lt.s32.totalorder %s20, 0
      %s208 = scalar_select %p207, %s20, 0
      %s209 = sadd.s32 %s208, %s206
      %s210 = smul.addr %s209, 4
      %s211 = scalar_lea.vmem %s1, %s210
      %p212 = pneg %p84
      %p213 = pneg %p81
      %p214 = scmp.lt.s32.totalorder %s20, 0
      %s215 = scalar_select %p214, %s20, 0
      %s216 = scalar_lea.vmem %s2, %s215
      %p217 = pneg %p110
      %p218 = pneg %p107
      %p219 = pneg %p138
      %p220 = pneg %p135
      %s221 = smul.u32 8, %s19
      %p222 = scmp.lt.s32.totalorder %s221, 15
      %s223 = scalar_select %p222, %s221, 15
      %p224 = scmp.lt.s32.totalorder %s20, 0
      %s225 = scalar_select %p224, %s20, 0
      %s226 = sadd.s32 %s225, %s223
      %s227 = smul.addr %s226, 4
      %s228 = scalar_lea.vmem %s3, %s227
      %s229 = smul.u32 8, %s19
      %p230 = scmp.lt.s32.totalorder %s229, 15
      %s231 = scalar_select %p230, %s229, 15
      %p232 = scmp.lt.s32.totalorder %s21, 0
      %s233 = scalar_select %p232, %s21, 0
      %s234 = sadd.s32 %s233, %s231
      %s235 = smul.addr %s234, 4
      %s236 = scalar_lea.vmem %s0, %s235
      %s237 = smul.u32 8, %s19
      %s238 = smul.u32 16, %s21
      %p239 = scmp.lt.s32.totalorder %s238, 15
      %s240 = scalar_select %p239, %s238, 15
      %p241 = scmp.lt.s32.totalorder %s20, 0
      %s242 = scalar_select %p241, %s20, 0
      %s243 = sadd.s32 %s242, %s240
      %s244 = smul.addr %s243, 4
      %s245 = scalar_lea.vmem %s1, %s244
      %s246 = smul.u32 16, %s21
      %p247 = scmp.lt.s32.totalorder %s20, 0
      %s248 = scalar_select %p247, %s20, 0
      %s249 = scalar_lea.vmem %s2, %s248
      %s250 = smul.u32 8, %s19
      %p251 = scmp.lt.s32.totalorder %s250, 15
      %s252 = scalar_select %p251, %s250, 15
      %p253 = scmp.lt.s32.totalorder %s20, 0
      %s254 = scalar_select %p253, %s20, 0
      %s255 = sadd.s32 %s254, %s252
      %s256 = smul.addr %s255, 4
      %s257 = scalar_lea.vmem %s3, %s256
      %s258 = smul.u32 8, %s19
      %p259 = scmp.eq.s32.totalorder %s21, 0
      // Predicated region
      $region33: #{discriminator_forward.3} parent=31 // pred_check
        %p260 = pneg %p259
      $region34: #{discriminator_forward.3} parent=31 // pred_check_branch
        %262 = sbr.rel (%p260) target = $region36
      $region35: #{discriminator_forward.3} parent=31 // pred_region
        %263 = vst [vmem:[#allocation2] sm:$0xff] 0.0
        %264 = vst [vmem:[#allocation2 + $0x8] sm:$0xff] 0.0
        %265 = vst [vmem:[#allocation2 + $0x10] sm:$0xff] 0.0
        %266 = vst [vmem:[#allocation2 + $0x18] sm:$0xff] 0.0
        %267 = vst [vmem:[#allocation2 + $0x20] sm:$0xff] 0.0
        %268 = vst [vmem:[#allocation2 + $0x28] sm:$0xff] 0.0
        %269 = vst [vmem:[#allocation2 + $0x30] sm:$0xff] 0.0
        %270 = vst [vmem:[#allocation2 + $0x38] sm:$0xff] 0.0
      $region36: #{discriminator_forward.3} parent=31 // pred_fallthru
        _
      %v271 = vld [vmem:[#allocation2] sm:$0xff]
      %v272 = vld [vmem:[#allocation2 + $0x8] sm:$0xff]
      %v273 = vld [vmem:[#allocation2 + $0x10] sm:$0xff]
      %v274 = vld [vmem:[#allocation2 + $0x18] sm:$0xff]
      %v275 = vld [vmem:[#allocation2 + $0x20] sm:$0xff]
      %v276 = vld [vmem:[#allocation2 + $0x28] sm:$0xff]
      %v277 = vld [vmem:[#allocation2 + $0x30] sm:$0xff]
      %v278 = vld [vmem:[#allocation2 + $0x38] sm:$0xff]
      %v279 = vld [vmem:[%s236] sm:$0xf]
      %v280 = vld [vmem:[%s236 + $0x4] sm:$0xf]
      %v281 = vld [vmem:[%s236 + $0x8] sm:$0xf]
      %v282 = vld [vmem:[%s236 + $0xc] sm:$0xf]
      %v283 = vld [vmem:[%s236 + $0x10] sm:$0xf]
      %v284 = vld [vmem:[%s236 + $0x14] sm:$0xf]
      %v285 = vld [vmem:[%s236 + $0x18] sm:$0xf]
      %v286 = vld [vmem:[%s236 + $0x1c] sm:$0xf]
      %v287 = vld [vmem:[%s245] sm:$0xf]
      %v288 = vld [vmem:[%s245 + $0x4] sm:$0xf]
      %v289 = vld [vmem:[%s245 + $0x8] sm:$0xf]
      %v290 = vld [vmem:[%s245 + $0xc] sm:$0xf]
      %v291 = vld [vmem:[%s245 + $0x10] sm:$0xf]
      %v292 = vld [vmem:[%s245 + $0x14] sm:$0xf]
      %v293 = vld [vmem:[%s245 + $0x18] sm:$0xf]
      %v294 = vld [vmem:[%s245 + $0x1c] sm:$0xf]
      %v295 = vld [vmem:[%s245 + $0x20] sm:$0xf]
      %v296 = vld [vmem:[%s245 + $0x24] sm:$0xf]
      %v297 = vld [vmem:[%s245 + $0x28] sm:$0xf]
      %v298 = vld [vmem:[%s245 + $0x2c] sm:$0xf]
      %v299 = vld [vmem:[%s245 + $0x30] sm:$0xf]
      %v300 = vld [vmem:[%s245 + $0x34] sm:$0xf]
      %v301 = vld [vmem:[%s245 + $0x38] sm:$0xf]
      %v302 = vld [vmem:[%s245 + $0x3c] sm:$0xf]
      %v311 = vunpack.c.l.b16 %v279
      %v312 = vunpack.c.l.b16 %v280
      %v313 = vunpack.c.l.b16 %v281
      %v314 = vunpack.c.l.b16 %v282
      %v315 = vunpack.c.l.b16 %v283
      %v316 = vunpack.c.l.b16 %v284
      %v317 = vunpack.c.l.b16 %v285
      %v318 = vunpack.c.l.b16 %v286
      %v319 = vpack.c.b16 %v312, %v311
      %v320 = vpack.c.b16 %v314, %v313
      %v321 = vpack.c.b16 %v316, %v315
      %v322 = vpack.c.b16 %v318, %v317
      %v343 = vunpack.c.l.b16 %v287
      %v344 = vunpack.c.l.b16 %v288
      %v345 = vunpack.c.l.b16 %v289
      %v346 = vunpack.c.l.b16 %v290
      %v347 = vunpack.c.l.b16 %v291
      %v348 = vunpack.c.l.b16 %v292
      %v349 = vunpack.c.l.b16 %v293
      %v350 = vunpack.c.l.b16 %v294
      %v351 = vunpack.c.l.b16 %v295
      %v352 = vunpack.c.l.b16 %v296
      %v353 = vunpack.c.l.b16 %v297
      %v354 = vunpack.c.l.b16 %v298
      %v355 = vunpack.c.l.b16 %v299
      %v356 = vunpack.c.l.b16 %v300
      %v357 = vunpack.c.l.b16 %v301
      %v358 = vunpack.c.l.b16 %v302
      %v359 = vpack.c.b16 %v344, %v343
      %v360 = vpack.c.b16 %v346, %v345
      %v361 = vpack.c.b16 %v348, %v347
      %v362 = vpack.c.b16 %v350, %v349
      %v363 = vpack.c.b16 %v352, %v351
      %v364 = vpack.c.b16 %v354, %v353
      %v365 = vpack.c.b16 %v356, %v355
      %v366 = vpack.c.b16 %v358, %v357
      %375 = vmatpush.bf16.msra.mxu0 %v366
      %376 = vmatpush.bf16.msra.mxu0 %v365
      %377 = vmatpush.bf16.msra.mxu0 %v364
      %378 = vmatpush.bf16.msra.mxu0 %v363
      %379 = vmatpush.bf16.msra.mxu0 %v362
      %380 = vmatpush.bf16.msra.mxu0 %v361
      %381 = vmatpush.bf16.msra.mxu0 %v360
      %382 = vmatpush.bf16.msra.mxu0 %v359
      %383 = vmatmul.bf16.gmra.mxu0 %v319
      %v384 = vpop.f32.mrf.mxu0
      %v385 = vadd.f32 0.0, %v384
      %v386 = vpop.f32.mrf.mxu0
      %v387 = vadd.f32 0.0, %v386
      %388 = vmatmul.bf16.gmra.mxu0 %v320
      %v389 = vpop.f32.mrf.mxu0
      %v390 = vadd.f32 0.0, %v389
      %v391 = vpop.f32.mrf.mxu0
      %v392 = vadd.f32 0.0, %v391
      %393 = vmatmul.bf16.gmra.mxu0 %v321
      %v394 = vpop.f32.mrf.mxu0
      %v395 = vadd.f32 0.0, %v394
      %v396 = vpop.f32.mrf.mxu0
      %v397 = vadd.f32 0.0, %v396
      %398 = vmatmul.bf16.gmra.mxu0 %v322
      %v399 = vpop.f32.mrf.mxu0
      %v400 = vadd.f32 0.0, %v399
      %v401 = vpop.f32.mrf.mxu0
      %v402 = vadd.f32 0.0, %v401
      %403 = vdwg.mxu0
      %v404 = vadd.f32 %v271, %v385
      %v405 = vadd.f32 %v272, %v387
      %v406 = vadd.f32 %v273, %v390
      %v407 = vadd.f32 %v274, %v392
      %v408 = vadd.f32 %v275, %v395
      %v409 = vadd.f32 %v276, %v397
      %v410 = vadd.f32 %v277, %v400
      %v411 = vadd.f32 %v278, %v402
      %412 = vst [vmem:[#allocation2] sm:$0xff] %v404
      %413 = vst [vmem:[#allocation2 + $0x8] sm:$0xff] %v405
      %414 = vst [vmem:[#allocation2 + $0x10] sm:$0xff] %v406
      %415 = vst [vmem:[#allocation2 + $0x18] sm:$0xff] %v407
      %416 = vst [vmem:[#allocation2 + $0x20] sm:$0xff] %v408
      %417 = vst [vmem:[#allocation2 + $0x28] sm:$0xff] %v409
      %418 = vst [vmem:[#allocation2 + $0x30] sm:$0xff] %v410
      %419 = vst [vmem:[#allocation2 + $0x38] sm:$0xff] %v411
      // Predicated region
      $region37: #{discriminator_forward.3} parent=31 // pred_check
        %p420 = pneg %p259
      $region38: #{discriminator_forward.3} parent=31 // pred_check_branch
        %422 = sbr.rel (%p420) target = $region40
      $region39: #{discriminator_forward.3} parent=31 // pred_region
        %v423 = vld [vmem:[#allocation2] sm:$0xff]
        %v424 = vld [vmem:[#allocation2 + $0x8] sm:$0xff]
        %v425 = vld [vmem:[#allocation2 + $0x10] sm:$0xff]
        %v426 = vld [vmem:[#allocation2 + $0x18] sm:$0xff]
        %v427 = vld [vmem:[#allocation2 + $0x20] sm:$0xff]
        %v428 = vld [vmem:[#allocation2 + $0x28] sm:$0xff]
        %v429 = vld [vmem:[#allocation2 + $0x30] sm:$0xff]
        %v430 = vld [vmem:[#allocation2 + $0x38] sm:$0xff]
        %v431 = vld [vmem:[%s249] sm:$0x1]
        %v433 = vperm.slane %v431, 0
        %v435 = vadd.f32 %v423, %v433
        %v436 = vadd.f32 %v424, %v433
        %v437 = vadd.f32 %v425, %v433
        %v438 = vadd.f32 %v426, %v433
        %v439 = vadd.f32 %v427, %v433
        %v440 = vadd.f32 %v428, %v433
        %v441 = vadd.f32 %v429, %v433
        %v442 = vadd.f32 %v430, %v433
        %vm443 = vcmp.ge.f32.partialorder %v435, 0.0
        %vm444 = vcmp.ge.f32.partialorder %v436, 0.0
        %vm445 = vcmp.ge.f32.partialorder %v437, 0.0
        %vm446 = vcmp.ge.f32.partialorder %v438, 0.0
        %vm447 = vcmp.ge.f32.partialorder %v439, 0.0
        %vm448 = vcmp.ge.f32.partialorder %v440, 0.0
        %vm449 = vcmp.ge.f32.partialorder %v441, 0.0
        %vm450 = vcmp.ge.f32.partialorder %v442, 0.0
        %v451 = vmul.f32 %v435, 0.01
        %v452 = vmul.f32 %v436, 0.01
        %v453 = vmul.f32 %v437, 0.01
        %v454 = vmul.f32 %v438, 0.01
        %v455 = vmul.f32 %v439, 0.01
        %v456 = vmul.f32 %v440, 0.01
        %v457 = vmul.f32 %v441, 0.01
        %v458 = vmul.f32 %v442, 0.01
        %v459 = vsel %vm443, %v435, %v451
        %v460 = vsel %vm444, %v436, %v452
        %v461 = vsel %vm445, %v437, %v453
        %v462 = vsel %vm446, %v438, %v454
        %v463 = vsel %vm447, %v439, %v455
        %v464 = vsel %vm448, %v440, %v456
        %v465 = vsel %vm449, %v441, %v457
        %v466 = vsel %vm450, %v442, %v458
        %v467 = vpack.c.bf16 %v459, %v459
        %v468 = vpack.c.bf16 %v460, %v460
        %v469 = vpack.c.bf16 %v461, %v461
        %v470 = vpack.c.bf16 %v462, %v462
        %v471 = vpack.c.bf16 %v463, %v463
        %v472 = vpack.c.bf16 %v464, %v464
        %v473 = vpack.c.bf16 %v465, %v465
        %v474 = vpack.c.bf16 %v466, %v466
        %475 = vst [vmem:[%s257] sm:$0xf] %v467
        %476 = vst [vmem:[%s257 + $0x4] sm:$0xf] %v468
        %477 = vst [vmem:[%s257 + $0x8] sm:$0xf] %v469
        %478 = vst [vmem:[%s257 + $0xc] sm:$0xf] %v470
        %479 = vst [vmem:[%s257 + $0x10] sm:$0xf] %v471
        %480 = vst [vmem:[%s257 + $0x14] sm:$0xf] %v472
        %481 = vst [vmem:[%s257 + $0x18] sm:$0xf] %v473
        %482 = vst [vmem:[%s257 + $0x1c] sm:$0xf] %v474
      $region40: #{discriminator_forward.3} parent=31 // pred_fallthru
        _
      %s483 = smul.u32 8, %s19
      %p484 = scmp.lt.s32.totalorder %s483, 15
      %s485 = scalar_select %p484, %s483, 15
      %p486 = scmp.lt.s32.totalorder %s20, 0
      %s487 = scalar_select %p486, %s20, 0
      %s488 = sadd.s32 %s487, %s485
      %s489 = smul.addr %s488, 4
      %s490 = scalar_lea.vmem %s3, %s489
      // Predicated region
      $region41: #{discriminator_forward.3} parent=31 // pred_check
        %p491 = pneg %p135
      $region42: #{discriminator_forward.3} parent=31 // pred_check_branch
        %493 = sbr.rel (%p491) target = $region44
      $region43: #{discriminator_forward.3} parent=31 // pred_region
        %s494 = smul.u32 8, %s19
      $region44: #{discriminator_forward.3} parent=31 // pred_fallthru
        _
    $region32: #{discriminator_forward.3} parent=5 // pred_fallthru
      _
    %p495 = scmp.le.s32.totalorder 2, %s9
    // Predicated region
    $region45: #{discriminator_forward.3} parent=5 // pred_check
      %p496 = pneg %p495
    $region46: #{discriminator_forward.3} parent=5 // pred_check_branch
      %498 = sbr.rel (%p496) target = $region48
    $region47: #{discriminator_forward.3} parent=5 // pred_region
      %s499 = ssub.s32 %s9, 2
      // Predicated region
      $region49: #{discriminator_forward.3} parent=47 // pred_check
        %p500 = pneg %p141
      $region50: #{discriminator_forward.3} parent=47 // pred_check_branch
        %502 = sbr.rel (%p500) target = $region52
      $region51: #{discriminator_forward.3} parent=47 // pred_region
        %s503 = smul.u32 8, %s22
        %p504 = scmp.lt.s32.totalorder %s503, 15
        %s505 = scalar_select %p504, %s503, 15
        %p506 = scmp.lt.s32.totalorder %s23, 0
        %s507 = scalar_select %p506, %s23, 0
        %s508 = sadd.s32 %s507, %s505
        %s509 = smul.addr %s508, 4
        %s510 = scalar_lea.vmem %s3, %s509
      $region52: #{discriminator_forward.3} parent=47 // pred_fallthru
        _
    $region48: #{discriminator_forward.3} parent=5 // pred_fallthru
      _
  $region6: #{discriminator_forward.3} parent=0 // loop_footer
    %s13 = sadd.s32 1, %s9
  $region7: #{discriminator_forward.3} parent=0 // loop_footer_branch
    %8 = sbr.rel target = $region3
  $region8: #{discriminator_forward.3} parent=0 // loop_exit
    _

// kernel: discriminator_forward.4
$region0: #{discriminator_forward.4}
  #allocation0 [shape = 'u32[]', space=smem, size = 0x4, offset = 0x4, fixed_abs, tag = 'smem constant byte address 0x4 - core index']
  #allocation1 [shape = 'u32[72,128]{1,0:T(1,128)}', space=vmem, size = 0x9000, scoped, tag = 'internal scratch']
  #allocation2 [shape = 'f32[16,128]{1,0:T(8,128)}', space=vmem, size = 0x2000, scoped, tag = 'scratch operand']
  %s0 = inlined_call_operand.vmem [shape: bf16[32,128], index: 0, kind: input, shape index: {}]
  %s1 = inlined_call_operand.vmem [shape: bf16[128,128], index: 1, kind: input, shape index: {}]
  %s2 = inlined_call_operand.vmem [shape: f32[1,128], index: 2, kind: input, shape index: {}]
  %s3 = inlined_call_operand.vmem [shape: bf16[32,128], index: 3, kind: output, shape index: {}]
  %s4 = sld [smem:[#allocation0]]
  $region53: #{discriminator_forward.4} parent=0
    _
  %s6 = ssub.s32 1, %s4
  %s7 = scalar_select 0, %s6, %s4
  loop: start=0, step=1, limit=4
  $region2: #{discriminator_forward.4} parent=0 // loop_pre_header
    _
  $region3: #{discriminator_forward.4} parent=0 // loop_header
    %s9 = sphi 0, %s13
    %p10 = scmp.ge.s32.totalorder %s9, 4
    %s16 = sphi 0, %s35
    %s17 = sphi 0, %s31
    %s18 = sphi 0, %s27
    %s19 = sphi 0, %s16
    %s20 = sphi 0, %s17
    %s21 = sphi 0, %s18
    %s22 = sphi 0, %s19
    %s23 = sphi 0, %s20
    %s24 = sphi 0, %s21
    %s40 = sphi 0, %s42
    %s43 = sphi 0, %s40
    %s44 = sphi 0, %s43
    %s60 = sphi 0, %s44
    %s68 = sphi 0, %s70
    %s71 = sphi 0, %s68
    %s72 = sphi 0, %s71
    %s88 = sphi 0, %s72
    %s94 = sphi 0, %s96
    %s97 = sphi 0, %s94
    %s98 = sphi 0, %s97
    %s114 = sphi 0, %s98
    %s122 = sphi 0, %s124
    %s125 = sphi 0, %s122
    %s126 = sphi 0, %s125
    %s142 = sphi 0, %s126
  $region4: #{discriminator_forward.4} parent=0 // loop_header_branch
    %12 = sbr.rel (%p10) target = $region8
  $region5: #{discriminator_forward.4} parent=0 // loop_body
    %s14 = ssub.s32 %s9, 1
    %s15 = ssub.s32 %s9, 2
    %s25 = sadd.s32 1, %s18
    %p26 = scmp.ge.s32.totalorder %s25, 1
    %s27 = scalar_select %p26, 0, %s25
    %s28 = sadd.s32 1, %s17
    %s29 = scalar_select %p26, %s28, %s17
    %p30 = scmp.ge.s32.totalorder %s29, 1
    %s31 = scalar_select %p30, 0, %s29
    %s32 = sadd.s32 1, %s16
    %s33 = scalar_select %p30, %s32, %s16
    %p34 = scmp.ge.s32.totalorder %s33, 2
    %s35 = scalar_select %p34, 0, %s33
    %s36 = ssub.s32 %s16, %s35
    %s37 = ssub.s32 %s18, %s27
    %s38 = sor.u32 %s36, %s37
    %p39 = scmp.eq.s32.totalorder %s38, 0
    %s41 = sadd.s32 %s40, 1
    %s42 = scalar_select %p39, %s40, %s41
    %p45 = pneg %p39
    %p46 = scmp.eq.s32.totalorder %s9, 1
    %p47 = por %p45, %p46
    %p48 = scmp.ne.s32.totalorder %s40, %s43
    %p49 = scmp.eq.s32.totalorder %s9, 0
    %p50 = por %p48, %p49
    %p51 = scmp.ne.s32.totalorder %s40, %s43
    %p52 = scmp.eq.s32.totalorder %s14, 1
    %p53 = por %p51, %p52
    %p54 = scmp.ne.s32.totalorder %s43, %s44
    %p55 = scmp.eq.s32.totalorder %s14, 0
    %p56 = por %p54, %p55
    %p57 = scmp.ne.s32.totalorder %s43, %s44
    %p58 = scmp.eq.s32.totalorder %s15, 1
    %p59 = por %p57, %p58
    %p61 = scmp.ne.s32.totalorder %s44, %s60
    %p62 = scmp.eq.s32.totalorder %s15, 0
    %p63 = por %p61, %p62
    %s64 = ssub.s32 %s18, %s27
    %s65 = ssub.s32 %s17, %s31
    %s66 = sor.u32 %s64, %s65
    %p67 = scmp.eq.s32.totalorder %s66, 0
    %s69 = sadd.s32 %s68, 1
    %s70 = scalar_select %p67, %s68, %s69
    %p73 = pneg %p67
    %p74 = scmp.eq.s32.totalorder %s9, 1
    %p75 = por %p73, %p74
    %p76 = scmp.ne.s32.totalorder %s68, %s71
    %p77 = scmp.eq.s32.totalorder %s9, 0
    %p78 = por %p76, %p77
    %p79 = scmp.ne.s32.totalorder %s68, %s71
    %p80 = scmp.eq.s32.totalorder %s14, 1
    %p81 = por %p79, %p80
    %p82 = scmp.ne.s32.totalorder %s71, %s72
    %p83 = scmp.eq.s32.totalorder %s14, 0
    %p84 = por %p82, %p83
    %p85 = scmp.ne.s32.totalorder %s71, %s72
    %p86 = scmp.eq.s32.totalorder %s15, 1
    %p87 = por %p85, %p86
    %p89 = scmp.ne.s32.totalorder %s72, %s88
    %p90 = scmp.eq.s32.totalorder %s15, 0
    %p91 = por %p89, %p90
    %s92 = ssub.s32 %s17, %s31
    %p93 = scmp.eq.s32.totalorder %s92, 0
    %s95 = sadd.s32 %s94, 1
    %s96 = scalar_select %p93, %s94, %s95
    %p99 = pneg %p93
    %p100 = scmp.eq.s32.totalorder %s9, 1
    %p101 = por %p99, %p100
    %p102 = scmp.ne.s32.totalorder %s94, %s97
    %p103 = scmp.eq.s32.totalorder %s9, 0
    %p104 = por %p102, %p103
    %p105 = scmp.ne.s32.totalorder %s94, %s97
    %p106 = scmp.eq.s32.totalorder %s14, 1
    %p107 = por %p105, %p106
    %p108 = scmp.ne.s32.totalorder %s97, %s98
    %p109 = scmp.eq.s32.totalorder %s14, 0
    %p110 = por %p108, %p109
    %p111 = scmp.ne.s32.totalorder %s97, %s98
    %p112 = scmp.eq.s32.totalorder %s15, 1
    %p113 = por %p111, %p112
    %p115 = scmp.ne.s32.totalorder %s98, %s114
    %p116 = scmp.eq.s32.totalorder %s15, 0
    %p117 = por %p115, %p116
    %s118 = ssub.s32 %s16, %s35
    %s119 = ssub.s32 %s17, %s31
    %s120 = sor.u32 %s118, %s119
    %p121 = scmp.eq.s32.totalorder %s120, 0
    %s123 = sadd.s32 %s122, 1
    %s124 = scalar_select %p121, %s122, %s123
    %p127 = pneg %p121
    %p128 = scmp.eq.s32.totalorder %s9, 1
    %p129 = por %p127, %p128
    %p130 = scmp.ne.s32.totalorder %s122, %s125
    %p131 = scmp.eq.s32.totalorder %s9, 0
    %p132 = por %p130, %p131
    %p133 = scmp.ne.s32.totalorder %s122, %s125
    %p134 = scmp.eq.s32.totalorder %s14, 1
    %p135 = por %p133, %p134
    %p136 = scmp.ne.s32.totalorder %s125, %s126
    %p137 = scmp.eq.s32.totalorder %s14, 0
    %p138 = por %p136, %p137
    %p139 = scmp.ne.s32.totalorder %s125, %s126
    %p140 = scmp.eq.s32.totalorder %s15, 1
    %p141 = por %p139, %p140
    %p143 = scmp.ne.s32.totalorder %s126, %s142
    %p144 = scmp.eq.s32.totalorder %s15, 0
    %p145 = por %p143, %p144
    %p146 = scmp.le.s32.totalorder 1, %s9
    %p147 = scmp.lt.s32.totalorder %s9, 3
    %p148 = pnand %p146, %p147
    %p149 = pneg %p148
    // Predicated region
    $region9: #{discriminator_forward.4} parent=5 // pred_check
      _
    $region10: #{discriminator_forward.4} parent=5 // pred_check_branch
      %151 = sbr.rel (%p148) target = $region12
    $region11: #{discriminator_forward.4} parent=5 // pred_region
      %s152 = ssub.s32 %s9, 1
      // Predicated region
      $region13: #{discriminator_forward.4} parent=11 // pred_check
        %p153 = pneg %p84
      $region14: #{discriminator_forward.4} parent=11 // pred_check_branch
        %155 = sbr.rel (%p153) target = $region16
      $region15: #{discriminator_forward.4} parent=11 // pred_region
        %s156 = smul.u32 16, %s21
        %p157 = scmp.lt.s32.totalorder %s156, 15
        %s158 = scalar_select %p157, %s156, 15
        %p159 = scmp.lt.s32.totalorder %s20, 0
        %s160 = scalar_select %p159, %s20, 0
        %s161 = sadd.s32 %s160, %s158
        %s162 = smul.addr %s161, 4
        %s163 = scalar_lea.vmem %s1, %s162
        %s164 = smul.u32 16, %s21
      $region16: #{discriminator_forward.4} parent=11 // pred_fallthru
        _
      // Predicated region
      $region17: #{discriminator_forward.4} parent=11 // pred_check
        %p165 = pneg %p110
      $region18: #{discriminator_forward.4} parent=11 // pred_check_branch
        %167 = sbr.rel (%p165) target = $region20
      $region19: #{discriminator_forward.4} parent=11 // pred_region
        %p168 = scmp.lt.s32.totalorder %s20, 0
        %s169 = scalar_select %p168, %s20, 0
        %s170 = scalar_lea.vmem %s2, %s169
      $region20: #{discriminator_forward.4} parent=11 // pred_fallthru
        _
    $region12: #{discriminator_forward.4} parent=5 // pred_fallthru
      _
    %p171 = scmp.lt.s32.totalorder %s9, 2
    // Predicated region
    $region21: #{discriminator_forward.4} parent=5 // pred_check
      %p172 = pneg %p171
    $region22: #{discriminator_forward.4} parent=5 // pred_check_branch
      %174 = sbr.rel (%p172) target = $region24
    $region23: #{discriminator_forward.4} parent=5 // pred_region
      // Predicated region
      $region25: #{discriminator_forward.4} parent=23 // pred_check
        %p175 = pneg %p50
      $region26: #{discriminator_forward.4} parent=23 // pred_check_branch
        %177 = sbr.rel (%p175) target = $region28
      $region27: #{discriminator_forward.4} parent=23 // pred_region
        %s178 = smul.u32 2, %s16
        %p179 = scmp.lt.s32.totalorder %s178, 3
        %s180 = scalar_select %p179, %s178, 3
        %p181 = scmp.lt.s32.totalorder %s18, 0
        %s182 = scalar_select %p181, %s18, 0
        %s183 = sadd.s32 %s182, %s180
        %s184 = smul.addr %s183, 4
        %s185 = scalar_lea.vmem %s0, %s184
        %s186 = smul.u32 2, %s16
      $region28: #{discriminator_forward.4} parent=23 // pred_fallthru
        _
    $region24: #{discriminator_forward.4} parent=5 // pred_fallthru
      _
    %p187 = scmp.le.s32.totalorder 1, %s9
    %p188 = scmp.lt.s32.totalorder %s9, 3
    %p189 = pnand %p187, %p188
    %p190 = pneg %p189
    // Predicated region
    $region29: #{discriminator_forward.4} parent=5 // pred_check
      _
    $region30: #{discriminator_forward.4} parent=5 // pred_check_branch
      %192 = sbr.rel (%p189) target = $region32
    $region31: #{discriminator_forward.4} parent=5 // pred_region
      %s193 = ssub.s32 %s9, 1
      %s194 = smul.u32 2, %s19
      %p195 = scmp.lt.s32.totalorder %s194, 3
      %s196 = scalar_select %p195, %s194, 3
      %p197 = scmp.lt.s32.totalorder %s21, 0
      %s198 = scalar_select %p197, %s21, 0
      %s199 = sadd.s32 %s198, %s196
      %s200 = smul.addr %s199, 4
      %s201 = scalar_lea.vmem %s0, %s200
      %p202 = pneg %p56
      %p203 = pneg %p53
      %s204 = smul.u32 16, %s21
      %p205 = scmp.lt.s32.totalorder %s204, 15
      %s206 = scalar_select %p205, %s204, 15
      %p207 = scmp.lt.s32.totalorder %s20, 0
      %s208 = scalar_select %p207, %s20, 0
      %s209 = sadd.s32 %s208, %s206
      %s210 = smul.addr %s209, 4
      %s211 = scalar_lea.vmem %s1, %s210
      %p212 = pneg %p84
      %p213 = pneg %p81
      %p214 = scmp.lt.s32.totalorder %s20, 0
      %s215 = scalar_select %p214, %s20, 0
      %s216 = scalar_lea.vmem %s2, %s215
      %p217 = pneg %p110
      %p218 = pneg %p107
      %p219 = pneg %p138
      %p220 = pneg %p135
      %s221 = smul.u32 2, %s19
      %p222 = scmp.lt.s32.totalorder %s221, 3
      %s223 = scalar_select %p222, %s221, 3
      %p224 = scmp.lt.s32.totalorder %s20, 0
      %s225 = scalar_select %p224, %s20, 0
      %s226 = sadd.s32 %s225, %s223
      %s227 = smul.addr %s226, 4
      %s228 = scalar_lea.vmem %s3, %s227
      %s229 = smul.u32 2, %s19
      %p230 = scmp.lt.s32.totalorder %s229, 3
      %s231 = scalar_select %p230, %s229, 3
      %p232 = scmp.lt.s32.totalorder %s21, 0
      %s233 = scalar_select %p232, %s21, 0
      %s234 = sadd.s32 %s233, %s231
      %s235 = smul.addr %s234, 4
      %s236 = scalar_lea.vmem %s0, %s235
      %s237 = smul.u32 2, %s19
      %s238 = smul.u32 16, %s21
      %p239 = scmp.lt.s32.totalorder %s238, 15
      %s240 = scalar_select %p239, %s238, 15
      %p241 = scmp.lt.s32.totalorder %s20, 0
      %s242 = scalar_select %p241, %s20, 0
      %s243 = sadd.s32 %s242, %s240
      %s244 = smul.addr %s243, 4
      %s245 = scalar_lea.vmem %s1, %s244
      %s246 = smul.u32 16, %s21
      %p247 = scmp.lt.s32.totalorder %s20, 0
      %s248 = scalar_select %p247, %s20, 0
      %s249 = scalar_lea.vmem %s2, %s248
      %s250 = smul.u32 2, %s19
      %p251 = scmp.lt.s32.totalorder %s250, 3
      %s252 = scalar_select %p251, %s250, 3
      %p253 = scmp.lt.s32.totalorder %s20, 0
      %s254 = scalar_select %p253, %s20, 0
      %s255 = sadd.s32 %s254, %s252
      %s256 = smul.addr %s255, 4
      %s257 = scalar_lea.vmem %s3, %s256
      %s258 = smul.u32 2, %s19
      %p259 = scmp.eq.s32.totalorder %s21, 0
      // Predicated region
      $region33: #{discriminator_forward.4} parent=31 // pred_check
        %p260 = pneg %p259
      $region34: #{discriminator_forward.4} parent=31 // pred_check_branch
        %262 = sbr.rel (%p260) target = $region36
      $region35: #{discriminator_forward.4} parent=31 // pred_region
        %263 = vst [vmem:[#allocation2] sm:$0xff] 0.0
        %264 = vst [vmem:[#allocation2 + $0x8] sm:$0xff] 0.0
      $region36: #{discriminator_forward.4} parent=31 // pred_fallthru
        _
      %v265 = vld [vmem:[#allocation2] sm:$0xff]
      %v266 = vld [vmem:[#allocation2 + $0x8] sm:$0xff]
      %v267 = vld [vmem:[%s236] sm:$0xf]
      %v268 = vld [vmem:[%s236 + $0x4] sm:$0xf]
      %v269 = vld [vmem:[%s245] sm:$0xf]
      %v270 = vld [vmem:[%s245 + $0x4] sm:$0xf]
      %v271 = vld [vmem:[%s245 + $0x8] sm:$0xf]
      %v272 = vld [vmem:[%s245 + $0xc] sm:$0xf]
      %v273 = vld [vmem:[%s245 + $0x10] sm:$0xf]
      %v274 = vld [vmem:[%s245 + $0x14] sm:$0xf]
      %v275 = vld [vmem:[%s245 + $0x18] sm:$0xf]
      %v276 = vld [vmem:[%s245 + $0x1c] sm:$0xf]
      %v277 = vld [vmem:[%s245 + $0x20] sm:$0xf]
      %v278 = vld [vmem:[%s245 + $0x24] sm:$0xf]
      %v279 = vld [vmem:[%s245 + $0x28] sm:$0xf]
      %v280 = vld [vmem:[%s245 + $0x2c] sm:$0xf]
      %v281 = vld [vmem:[%s245 + $0x30] sm:$0xf]
      %v282 = vld [vmem:[%s245 + $0x34] sm:$0xf]
      %v283 = vld [vmem:[%s245 + $0x38] sm:$0xf]
      %v284 = vld [vmem:[%s245 + $0x3c] sm:$0xf]
      %v287 = vunpack.c.l.b16 %v267
      %v288 = vunpack.c.l.b16 %v268
      %v289 = vpack.c.b16 %v288, %v287
      %v307 = vunpack.c.l.b16 %v269
      %v308 = vunpack.c.l.b16 %v270
      %v309 = vunpack.c.l.b16 %v271
      %v310 = vunpack.c.l.b16 %v272
      %v311 = vunpack.c.l.b16 %v273
      %v312 = vunpack.c.l.b16 %v274
      %v313 = vunpack.c.l.b16 %v275
      %v314 = vunpack.c.l.b16 %v276
      %v315 = vunpack.c.l.b16 %v277
      %v316 = vunpack.c.l.b16 %v278
      %v317 = vunpack.c.l.b16 %v279
      %v318 = vunpack.c.l.b16 %v280
      %v319 = vunpack.c.l.b16 %v281
      %v320 = vunpack.c.l.b16 %v282
      %v321 = vunpack.c.l.b16 %v283
      %v322 = vunpack.c.l.b16 %v284
      %v323 = vpack.c.b16 %v308, %v307
      %v324 = vpack.c.b16 %v310, %v309
      %v325 = vpack.c.b16 %v312, %v311
      %v326 = vpack.c.b16 %v314, %v313
      %v327 = vpack.c.b16 %v316, %v315
      %v328 = vpack.c.b16 %v318, %v317
      %v329 = vpack.c.b16 %v320, %v319
      %v330 = vpack.c.b16 %v322, %v321
      %339 = vmatpush.bf16.msra.mxu0 %v330
      %340 = vmatpush.bf16.msra.mxu0 %v329
      %341 = vmatpush.bf16.msra.mxu0 %v328
      %342 = vmatpush.bf16.msra.mxu0 %v327
      %343 = vmatpush.bf16.msra.mxu0 %v326
      %344 = vmatpush.bf16.msra.mxu0 %v325
      %345 = vmatpush.bf16.msra.mxu0 %v324
      %346 = vmatpush.bf16.msra.mxu0 %v323
      %347 = vmatmul.bf16.gmra.mxu0 %v289
      %v348 = vpop.f32.mrf.mxu0
      %v349 = vadd.f32 0.0, %v348
      %v350 = vpop.f32.mrf.mxu0
      %v351 = vadd.f32 0.0, %v350
      %352 = vdwg.mxu0
      %v353 = vadd.f32 %v265, %v349
      %v354 = vadd.f32 %v266, %v351
      %355 = vst [vmem:[#allocation2] sm:$0xff] %v353
      %356 = vst [vmem:[#allocation2 + $0x8] sm:$0xff] %v354
      // Predicated region
      $region37: #{discriminator_forward.4} parent=31 // pred_check
        %p357 = pneg %p259
      $region38: #{discriminator_forward.4} parent=31 // pred_check_branch
        %359 = sbr.rel (%p357) target = $region40
      $region39: #{discriminator_forward.4} parent=31 // pred_region
        %v360 = vld [vmem:[#allocation2] sm:$0xff]
        %v361 = vld [vmem:[#allocation2 + $0x8] sm:$0xff]
        %v362 = vld [vmem:[%s249] sm:$0x1]
        %v364 = vperm.slane %v362, 0
        %v366 = vadd.f32 %v360, %v364
        %v367 = vadd.f32 %v361, %v364
        %vm368 = vcmp.ge.f32.partialorder %v366, 0.0
        %vm369 = vcmp.ge.f32.partialorder %v367, 0.0
        %v370 = vmul.f32 %v366, 0.01
        %v371 = vmul.f32 %v367, 0.01
        %v372 = vsel %vm368, %v366, %v370
        %v373 = vsel %vm369, %v367, %v371
        %v374 = vpack.c.bf16 %v372, %v372
        %v375 = vpack.c.bf16 %v373, %v373
        %376 = vst [vmem:[%s257] sm:$0xf] %v374
        %377 = vst [vmem:[%s257 + $0x4] sm:$0xf] %v375
      $region40: #{discriminator_forward.4} parent=31 // pred_fallthru
        _
      %s378 = smul.u32 2, %s19
      %p379 = scmp.lt.s32.totalorder %s378, 3
      %s380 = scalar_select %p379, %s378, 3
      %p381 = scmp.lt.s32.totalorder %s20, 0
      %s382 = scalar_select %p381, %s20, 0
      %s383 = sadd.s32 %s382, %s380
      %s384 = smul.addr %s383, 4
      %s385 = scalar_lea.vmem %s3, %s384
      // Predicated region
      $region41: #{discriminator_forward.4} parent=31 // pred_check
        %p386 = pneg %p135
      $region42: #{discriminator_forward.4} parent=31 // pred_check_branch
        %388 = sbr.rel (%p386) target = $region44
      $region43: #{discriminator_forward.4} parent=31 // pred_region
        %s389 = smul.u32 2, %s19
      $region44: #{discriminator_forward.4} parent=31 // pred_fallthru
        _
    $region32: #{discriminator_forward.4} parent=5 // pred_fallthru
      _
    %p390 = scmp.le.s32.totalorder 2, %s9
    // Predicated region
    $region45: #{discriminator_forward.4} parent=5 // pred_check
      %p391 = pneg %p390
    $region46: #{discriminator_forward.4} parent=5 // pred_check_branch
      %393 = sbr.rel (%p391) target = $region48
    $region47: #{discriminator_forward.4} parent=5 // pred_region
      %s394 = ssub.s32 %s9, 2
      // Predicated region
      $region49: #{discriminator_forward.4} parent=47 // pred_check
        %p395 = pneg %p141
      $region50: #{discriminator_forward.4} parent=47 // pred_check_branch
        %397 = sbr.rel (%p395) target = $region52
      $region51: #{discriminator_forward.4} parent=47 // pred_region
        %s398 = smul.u32 2, %s22
        %p399 = scmp.lt.s32.totalorder %s398, 3
        %s400 = scalar_select %p399, %s398, 3
        %p401 = scmp.lt.s32.totalorder %s23, 0
        %s402 = scalar_select %p401, %s23, 0
        %s403 = sadd.s32 %s402, %s400
        %s404 = smul.addr %s403, 4
        %s405 = scalar_lea.vmem %s3, %s404
      $region52: #{discriminator_forward.4} parent=47 // pred_fallthru
        _
    $region48: #{discriminator_forward.4} parent=5 // pred_fallthru
      _
  $region6: #{discriminator_forward.4} parent=0 // loop_footer
    %s13 = sadd.s32 1, %s9
  $region7: #{discriminator_forward.4} parent=0 // loop_footer_branch
    %8 = sbr.rel target = $region3
  $region8: #{discriminator_forward.4} parent=0 // loop_exit
    _

// kernel: reverse
$region0: #{reverse}
  #allocation0 [shape = 's32[1]{0}', space=sflag, size = 0x4, scoped, tag = 'scoped memory for reverse']
  %s0 = inlined_call_operand.vmem [shape: f32[1,32,3,3], index: 0, kind: input, shape index: {}]
  %s1 = inlined_call_operand.vmem [shape: bf16[1,32,3,3], index: 1, kind: output, shape index: {}]
  %s2 = scalar_lea.vmem %s0, 8
  %v3 = vld [vmem:[%s2] sm:$0x1]
  %v4 = vpack.c.bf16 0.0, %v3
  %5 = vst [vmem:[%s1] sm:$0x1] %v4
  %s6 = scalar_lea.vmem %s0, 5
  %v7 = vld [vmem:[%s6] sm:$0x1]
  %s8 = scalar_lea.vmem %s1, 3
  %v9 = vpack.c.bf16 0.0, %v7
  %10 = vst [vmem:[%s8] sm:$0x1] %v9
  %s11 = scalar_lea.vmem %s0, 2
  %v12 = vld [vmem:[%s11] sm:$0x1]
  %s13 = scalar_lea.vmem %s1, 6
  %v14 = vpack.c.bf16 0.0, %v12
  %15 = vst [vmem:[%s13] sm:$0x1] %v14
  %s16 = scalar_lea.vmem %s0, 7
  %v17 = vld [vmem:[%s16] sm:$0x1]
  %s18 = scalar_lea.vmem %s1, 1
  %v19 = vpack.c.bf16 0.0, %v17
  %20 = vst [vmem:[%s18] sm:$0x1] %v19
  %s21 = scalar_lea.vmem %s0, 4
  %v22 = vld [vmem:[%s21] sm:$0x1]
  %s23 = scalar_lea.vmem %s1, 4
  %v24 = vpack.c.bf16 0.0, %v22
  %25 = vst [vmem:[%s23] sm:$0x1] %v24
  %s26 = scalar_lea.vmem %s0, 1
  %v27 = vld [vmem:[%s26] sm:$0x1]
  %s28 = scalar_lea.vmem %s1, 7
  %v29 = vpack.c.bf16 0.0, %v27
  %30 = vst [vmem:[%s28] sm:$0x1] %v29
  %s31 = scalar_lea.vmem %s0, 6
  %v32 = vld [vmem:[%s31] sm:$0x1]
  %s33 = scalar_lea.vmem %s1, 2
  %v34 = vpack.c.bf16 0.0, %v32
  %35 = vst [vmem:[%s33] sm:$0x1] %v34
  %s36 = scalar_lea.vmem %s0, 3
  %v37 = vld [vmem:[%s36] sm:$0x1]
  %s38 = scalar_lea.vmem %s1, 5
  %v39 = vpack.c.bf16 0.0, %v37
  %40 = vst [vmem:[%s38] sm:$0x1] %v39
  %v41 = vld [vmem:[%s0] sm:$0x1]
  %s42 = scalar_lea.vmem %s1, 8
  %v43 = vpack.c.bf16 0.0, %v41
  %44 = vst [vmem:[%s42] sm:$0x1] %v43

// kernel: discriminator_forward.5
$region0: #{discriminator_forward.5}
  #allocation0 [shape = 'u32[]', space=smem, size = 0x4, offset = 0x4, fixed_abs, tag = 'smem constant byte address 0x4 - core index']
  #allocation1 [shape = 'u32[72,128]{1,0:T(1,128)}', space=vmem, size = 0x9000, scoped, tag = 'internal scratch']
  #allocation2 [shape = 'f32[8,128]{1,0:T(8,128)}', space=vmem, size = 0x1000, scoped, tag = 'scratch operand']
  %s0 = inlined_call_operand.vmem [shape: bf16[8,256], index: 0, kind: input, shape index: {}]
  %s1 = inlined_call_operand.vmem [shape: bf16[256,128], index: 1, kind: input, shape index: {}]
  %s2 = inlined_call_operand.vmem [shape: f32[1,128], index: 2, kind: input, shape index: {}]
  %s3 = inlined_call_operand.vmem [shape: bf16[8,128], index: 3, kind: output, shape index: {}]
  %s4 = sld [smem:[#allocation0]]
  $region30: #{discriminator_forward.5} parent=0
    _
  %s6 = ssub.s32 1, %s4
  %s7 = scalar_select 0, %s6, %s4
  // Predicated region
  $region2: #{discriminator_forward.5} parent=0 // pred_check
    _
  $region3: #{discriminator_forward.5} parent=0 // pred_check_branch
    %9 = sbr.rel (0) target = $region5
  $region4: #{discriminator_forward.5} parent=0 // pred_region
    _
  $region5: #{discriminator_forward.5} parent=0 // pred_fallthru
    _
  // Predicated region
  $region6: #{discriminator_forward.5} parent=0 // pred_check
    _
  $region7: #{discriminator_forward.5} parent=0 // pred_check_branch
    %11 = sbr.rel (0) target = $region9
  $region8: #{discriminator_forward.5} parent=0 // pred_region
    _
  $region9: #{discriminator_forward.5} parent=0 // pred_fallthru
    _
  // Predicated region
  $region10: #{discriminator_forward.5} parent=0 // pred_check
    _
  $region11: #{discriminator_forward.5} parent=0 // pred_check_branch
    %13 = sbr.rel (0) target = $region13
  $region12: #{discriminator_forward.5} parent=0 // pred_region
    _
  $region13: #{discriminator_forward.5} parent=0 // pred_fallthru
    _
  %p14 = scmp.eq.s32.totalorder 0, 0
  // Predicated region
  $region14: #{discriminator_forward.5} parent=0 // pred_check
    %p15 = pneg %p14
  $region15: #{discriminator_forward.5} parent=0 // pred_check_branch
    %17 = sbr.rel (%p15) target = $region17
  $region16: #{discriminator_forward.5} parent=0 // pred_region
    %18 = vst [vmem:[#allocation2] sm:$0xff] 0.0
  $region17: #{discriminator_forward.5} parent=0 // pred_fallthru
    _
  %v19 = vld [vmem:[#allocation2] sm:$0xff]
  %v20 = vld [vmem:[%s0] sm:$0xff]
  %v21 = vld [vmem:[%s1] sm:$0xf]
  %v22 = vld [vmem:[%s1 + $0x4] sm:$0xf]
  %v23 = vld [vmem:[%s1 + $0x8] sm:$0xf]
  %v24 = vld [vmem:[%s1 + $0xc] sm:$0xf]
  %v25 = vld [vmem:[%s1 + $0x10] sm:$0xf]
  %v26 = vld [vmem:[%s1 + $0x14] sm:$0xf]
  %v27 = vld [vmem:[%s1 + $0x18] sm:$0xf]
  %v28 = vld [vmem:[%s1 + $0x1c] sm:$0xf]
  %v29 = vld [vmem:[%s1 + $0x20] sm:$0xf]
  %v30 = vld [vmem:[%s1 + $0x24] sm:$0xf]
  %v31 = vld [vmem:[%s1 + $0x28] sm:$0xf]
  %v32 = vld [vmem:[%s1 + $0x2c] sm:$0xf]
  %v33 = vld [vmem:[%s1 + $0x30] sm:$0xf]
  %v34 = vld [vmem:[%s1 + $0x34] sm:$0xf]
  %v35 = vld [vmem:[%s1 + $0x38] sm:$0xf]
  %v36 = vld [vmem:[%s1 + $0x3c] sm:$0xf]
  %v37 = vld [vmem:[%s1 + $0x40] sm:$0xf]
  %v38 = vld [vmem:[%s1 + $0x44] sm:$0xf]
  %v39 = vld [vmem:[%s1 + $0x48] sm:$0xf]
  %v40 = vld [vmem:[%s1 + $0x4c] sm:$0xf]
  %v41 = vld [vmem:[%s1 + $0x50] sm:$0xf]
  %v42 = vld [vmem:[%s1 + $0x54] sm:$0xf]
  %v43 = vld [vmem:[%s1 + $0x58] sm:$0xf]
  %v44 = vld [vmem:[%s1 + $0x5c] sm:$0xf]
  %v45 = vld [vmem:[%s1 + $0x60] sm:$0xf]
  %v46 = vld [vmem:[%s1 + $0x64] sm:$0xf]
  %v47 = vld [vmem:[%s1 + $0x68] sm:$0xf]
  %v48 = vld [vmem:[%s1 + $0x6c] sm:$0xf]
  %v49 = vld [vmem:[%s1 + $0x70] sm:$0xf]
  %v50 = vld [vmem:[%s1 + $0x74] sm:$0xf]
  %v51 = vld [vmem:[%s1 + $0x78] sm:$0xf]
  %v52 = vld [vmem:[%s1 + $0x7c] sm:$0xf]
  %v54 = vunpack.c.l.b16 %v20
  %v55 = vunpack.c.h.b16 %v20
  %v56 = vpack.c.b16 %v54, %v54
  %v57 = vpack.c.b16 %v55, %v55
  %v92 = vunpack.c.l.b16 %v21
  %v93 = vunpack.c.l.b16 %v22
  %v94 = vunpack.c.l.b16 %v23
  %v95 = vunpack.c.l.b16 %v24
  %v96 = vunpack.c.l.b16 %v25
  %v97 = vunpack.c.l.b16 %v26
  %v98 = vunpack.c.l.b16 %v27
  %v99 = vunpack.c.l.b16 %v28
  %v100 = vunpack.c.l.b16 %v29
  %v101 = vunpack.c.l.b16 %v30
  %v102 = vunpack.c.l.b16 %v31
  %v103 = vunpack.c.l.b16 %v32
  %v104 = vunpack.c.l.b16 %v33
  %v105 = vunpack.c.l.b16 %v34
  %v106 = vunpack.c.l.b16 %v35
  %v107 = vunpack.c.l.b16 %v36
  %v108 = vunpack.c.l.b16 %v37
  %v109 = vunpack.c.l.b16 %v38
  %v110 = vunpack.c.l.b16 %v39
  %v111 = vunpack.c.l.b16 %v40
  %v112 = vunpack.c.l.b16 %v41
  %v113 = vunpack.c.l.b16 %v42
  %v114 = vunpack.c.l.b16 %v43
  %v115 = vunpack.c.l.b16 %v44
  %v116 = vunpack.c.l.b16 %v45
  %v117 = vunpack.c.l.b16 %v46
  %v118 = vunpack.c.l.b16 %v47
  %v119 = vunpack.c.l.b16 %v48
  %v120 = vunpack.c.l.b16 %v49
  %v121 = vunpack.c.l.b16 %v50
  %v122 = vunpack.c.l.b16 %v51
  %v123 = vunpack.c.l.b16 %v52
  %v124 = vpack.c.b16 %v93, %v92
  %v125 = vpack.c.b16 %v95, %v94
  %v126 = vpack.c.b16 %v97, %v96
  %v127 = vpack.c.b16 %v99, %v98
  %v128 = vpack.c.b16 %v101, %v100
  %v129 = vpack.c.b16 %v103, %v102
  %v130 = vpack.c.b16 %v105, %v104
  %v131 = vpack.c.b16 %v107, %v106
  %v132 = vpack.c.b16 %v109, %v108
  %v133 = vpack.c.b16 %v111, %v110
  %v134 = vpack.c.b16 %v113, %v112
  %v135 = vpack.c.b16 %v115, %v114
  %v136 = vpack.c.b16 %v117, %v116
  %v137 = vpack.c.b16 %v119, %v118
  %v138 = vpack.c.b16 %v121, %v120
  %v139 = vpack.c.b16 %v123, %v122
  %156 = vmatpush.bf16.msra.mxu0 %v131
  %157 = vmatpush.bf16.msra.mxu0 %v130
  %158 = vmatpush.bf16.msra.mxu0 %v129
  %159 = vmatpush.bf16.msra.mxu0 %v128
  %160 = vmatpush.bf16.msra.mxu0 %v127
  %161 = vmatpush.bf16.msra.mxu0 %v126
  %162 = vmatpush.bf16.msra.mxu0 %v125
  %163 = vmatpush.bf16.msra.mxu0 %v124
  %164 = vmatmul.bf16.gmra.mxu0 %v56
  %v165 = vpop.f32.mrf.mxu0
  %v166 = vadd.f32 0.0, %v165
  %v167 = vpop.f32.mrf.mxu0
  %168 = vdwg.mxu0
  %169 = vmatpush.bf16.msra.mxu0 %v139
  %170 = vmatpush.bf16.msra.mxu0 %v138
  %171 = vmatpush.bf16.msra.mxu0 %v137
  %172 = vmatpush.bf16.msra.mxu0 %v136
  %173 = vmatpush.bf16.msra.mxu0 %v135
  %174 = vmatpush.bf16.msra.mxu0 %v134
  %175 = vmatpush.bf16.msra.mxu0 %v133
  %176 = vmatpush.bf16.msra.mxu0 %v132
  %177 = vmatmul.bf16.gmra.mxu0 %v57
  %v178 = vpop.f32.mrf.mxu0
  %v179 = vadd.f32 %v166, %v178
  %v180 = vpop.f32.mrf.mxu0
  %181 = vdwg.mxu0
  %v182 = vadd.f32 %v19, %v179
  %183 = vst [vmem:[#allocation2] sm:$0xff] %v182
  // Predicated region
  $region18: #{discriminator_forward.5} parent=0 // pred_check
    %p184 = pneg %p14
  $region19: #{discriminator_forward.5} parent=0 // pred_check_branch
    %186 = sbr.rel (%p184) target = $region21
  $region20: #{discriminator_forward.5} parent=0 // pred_region
    %v187 = vld [vmem:[#allocation2] sm:$0xff]
    %v188 = vld [vmem:[%s2] sm:$0x1]
    %v190 = vperm.slane %v188, 0
    %v192 = vadd.f32 %v187, %v190
    %vm193 = vcmp.ge.f32.partialorder %v192, 0.0
    %v194 = vmul.f32 %v192, 0.01
    %v195 = vsel %vm193, %v192, %v194
    %v196 = vpack.c.bf16 %v195, %v195
    %197 = vst [vmem:[%s3] sm:$0xf] %v196
  $region21: #{discriminator_forward.5} parent=0 // pred_fallthru
    _
  // Predicated region
  $region22: #{discriminator_forward.5} parent=0 // pred_check
    _
  $region23: #{discriminator_forward.5} parent=0 // pred_check_branch
    %199 = sbr.rel (0) target = $region25
  $region24: #{discriminator_forward.5} parent=0 // pred_region
    _
  $region25: #{discriminator_forward.5} parent=0 // pred_fallthru
    _
  // Predicated region
  $region26: #{discriminator_forward.5} parent=0 // pred_check
    _
  $region27: #{discriminator_forward.5} parent=0 // pred_check_branch
    %201 = sbr.rel (0) target = $region29
  $region28: #{discriminator_forward.5} parent=0 // pred_region
    _
  $region29: #{discriminator_forward.5} parent=0 // pred_fallthru
    _

</llo_original>
